<compile_context>
chip_gen: v5e
topology: v5e:2x2
jax: 0.10.0
libtpu: 0.0.40
codegen_flags: <defaults>
</compile_context>

<pallas_src>
import math
import functools

import numpy as np
import jax
import jax.numpy as jnp
from jax.experimental import pallas as pl
from jax.experimental.pallas import tpu as pltpu


_WEIGHT_NAMES = ("w1", "b1", "w2", "b2", "wq", "bq", "wk", "bk", "wv", "bv", "wd", "bd")
_MXU_WEIGHTS = ("w1", "w2", "wq", "wk", "wv", "wd")
_REFS_PER_LAYER = len(_WEIGHT_NAMES) + 2          # + qsel, vsel constant masks


# ----------------------------------------------------------------------------
# Fused Pallas kernel: full GAT stack forward for one (bt, n, *) batch tile.
# refs = 14 refs per layer (w1..bd, qsel, vsel), then out_ref, attn_ref.
# ----------------------------------------------------------------------------
def _gat_fused_kernel(bt, n, heads, matmul_dtype, x_ref, mask_ref, *refs):
    num_layers = len(heads)
    out_ref = refs[_REFS_PER_LAYER * num_layers]
    attn_ref = refs[_REFS_PER_LAYER * num_layers + 1]
    cd = matmul_dtype

    def dense(a, w_ref, b_ref):
        # y = a @ W + b, f32 accumulation (W may be pre-cast to bf16 in the wrapper).
        return (jnp.dot(a.astype(cd), w_ref[...].astype(cd),
                        preferred_element_type=jnp.float32) + b_ref[...])

    # Hoisted once for ALL layers and ALL heads: additive attention-mask bias.
    mask_bias = jnp.where(mask_ref[...] < 0.1, -1.0e10, 0.0)        # (bt, n, n)
    bias_stack_cache = {}                                           # keyed by head count

    def gat_layer(x2d, num_heads, head_size, layer_refs):
        (w1, b1, w2, b2, wq, bq, wk, bk, wv, bv, wd, bd,
         qsel_ref, vsel_ref) = layer_refs
        hd = num_heads * head_size

        # embedding MLP + Q/K/V projections, all with M = bt*n rows.
        h = jnp.maximum(dense(x2d, w1, b1), 0.0)
        emb = jnp.maximum(dense(h, w2, b2), 0.0)                    # (bt*n, E)
        q = dense(emb, wq, bq)                                      # (bt*n, hd)
        k = dense(emb, wk, bk)
        v = dense(emb, wv, bv)

        # lane-preserving (tile-aligned) reshapes to a batched view for attention
        q3 = q.reshape(bt, n, hd)
        k3 = k.reshape(bt, n, hd)
        v3 = v.reshape(bt, n, hd)

        # Stacked additive mask bias (bt, H*n, n), built once per distinct head count.
        if num_heads not in bias_stack_cache:
            bias_stack_cache[num_heads] = (
                mask_bias if num_heads == 1
                else jnp.concatenate([mask_bias] * num_heads, axis=1))
        bias_stack = bias_stack_cache[num_heads]

        # Head-stacked, head-masked, pre-scaled queries: (bt, H*n, hd).
        # qsel is a trace-time constant input (1/sqrt(D) folded in), so building
        # q_stack costs one sublane concat + one VPU mul -- no per-head iota/selects.
        q_stack = q3 if num_heads == 1 else jnp.concatenate([q3] * num_heads, axis=1)
        q_stack = q_stack * qsel_ref[...][None]

        # ONE score contraction per layer (K relayout paid once, not per head).
        s = jnp.einsum("bqd,bkd->bqk", q_stack.astype(cd), k3.astype(cd),
                       preferred_element_type=jnp.float32)          # (bt, H*n, n)
        s = s + bias_stack                                          # masked_fill_ semantics
        s = s - jnp.max(s, axis=-1, keepdims=True)
        p = jnp.exp(s)
        denom = jnp.sum(p, axis=-1, keepdims=True)
        inv = pl.reciprocal(denom, approx=True)                     # EUP slot (otherwise idle)
        inv = inv * (2.0 - denom * inv)                             # one Newton step -> f32-tight
        p = p * inv                                                 # (bt, H*n, n)

        # ONE context contraction per layer; fold the H sublane blocks back into
        # (bt, n, hd) with lane-masked adds (vsel is a trace-time constant input).
        ctx_stack = jnp.einsum("bqk,bkd->bqd", p.astype(cd), v3.astype(cd),
                               preferred_element_type=jnp.float32)  # (bt, H*n, hd)
        ctx_stack = ctx_stack * vsel_ref[...][None]

        ctx = ctx_stack[:, 0:n, :]
        attn = p[:, 0:n, :]
        for hh in range(1, num_heads):                              # tiny static fold-back
            ctx = ctx + ctx_stack[:, hh * n:(hh + 1) * n, :]
            attn = attn + p[:, hh * n:(hh + 1) * n, :]

        out2d = dense(ctx.reshape(bt * n, hd), wd, bd)              # (bt*n, E or E_pad)
        return out2d, attn * (1.0 / num_heads)

    x2d = x_ref[...]                                                # (bt*n, F_in)
    attn = None
    for li in range(num_layers):                                    # layer fusion (static)
        layer_refs = refs[_REFS_PER_LAYER * li:_REFS_PER_LAYER * (li + 1)]
        x2d, attn = gat_layer(x2d, heads[li][0], heads[li][1], layer_refs)

    out_ref[...] = x2d                                              # full-width unmasked store
    attn_ref[...] = attn


# ----------------------------------------------------------------------------
# Trace-time constant head masks (built with numpy in the wrapper; DMA'd once).
#   qsel[h*n+i, c] = 1/sqrt(D) if lane c belongs to head h else 0
#   vsel[h*n+i, c] = 1          if lane c belongs to head h else 0
# ----------------------------------------------------------------------------
def _head_masks(num_heads, head_size, n):
    hd = num_heads * head_size
    lane = np.arange(hd)
    scale = 1.0 / math.sqrt(head_size)
    qsel = np.zeros((num_heads * n, hd), np.float32)
    vsel = np.zeros((num_heads * n, hd), np.float32)
    for h in range(num_heads):
        in_h = ((lane >= h * head_size) & (lane < (h + 1) * head_size)).astype(np.float32)
        qsel[h * n:(h + 1) * n, :] = in_h * scale
        vsel[h * n:(h + 1) * n, :] = in_h
    return jnp.asarray(qsel), jnp.asarray(vsel)


# ----------------------------------------------------------------------------
# Wrapper: one pallas_call for the whole GAT stack over the whole batch.
# Returns [output, attn_mask, attn], matching the torch module.
# ----------------------------------------------------------------------------
def gat_forward(layers, x, mask, *, batch_block=None, matmul_dtype=jnp.float32):
    B, N, F0 = x.shape
    E_out = layers[-1]["wd"].shape[1]
    E_pad = ((E_out + 127) // 128) * 128        # lane-dense output width (unmasked vst)

    if batch_block is None:
        batch_block = B     # one grid step: best on single-TC v5e/v6e at these shapes
        # TODO(synk): on v7x (2 TensorCores/chip) pass batch_block = B // 2 once the
        # per-step work is compute-bound, and re-budget VMEM against 64 MiB.
    assert B % batch_block == 0
    nb = B // batch_block

    heads = tuple((p["num_heads"], p["head_size"]) for p in layers)
    num_layers = len(layers)

    weights = []
    for li, p in enumerate(layers):
        for nm in _WEIGHT_NAMES:
            w = p[nm]
            if li == num_layers - 1 and nm in ("wd", "bd") and E_pad != E_out:
                w = jnp.pad(w, ((0, 0), (0, E_pad - E_out)))   # zero-pad output projection
            if matmul_dtype != jnp.float32 and nm in _MXU_WEIGHTS:
                w = w.astype(matmul_dtype)      # halves weight DMA bytes on v6e/v7x
            weights.append(w)
        qsel, vsel = _head_masks(p["num_heads"], p["head_size"], N)
        weights.append(qsel)
        weights.append(vsel)

    x2d = x.reshape(B * N, F0)                  # free reshape outside the kernel

    # Weight / constant inputs: block index never changes, so single-buffer them when
    # the batch axis actually pipelines (saves VMEM; matters most under v7x's 64 MiB).
    if nb > 1:
        weight_specs = [pl.BlockSpec(w.shape, lambda i: (0, 0),
                                     pipeline_mode=pl.Buffered(1)) for w in weights]
    else:
        weight_specs = [pl.BlockSpec(w.shape, lambda i: (0, 0)) for w in weights]

    in_specs = [
        pl.BlockSpec((batch_block * N, F0), lambda i: (i, 0)),
        pl.BlockSpec((batch_block, N, N), lambda i: (i, 0, 0)),
    ] + weight_specs

    out_specs = (
        pl.BlockSpec((batch_block * N, E_pad), lambda i: (i, 0)),
        pl.BlockSpec((batch_block, N, N), lambda i: (i, 0, 0)),
    )
    out_shape = (
        jax.ShapeDtypeStruct((B * N, E_pad), jnp.float32),
        jax.ShapeDtypeStruct((B, N, N), jnp.float32),
    )

    kernel = functools.partial(_gat_fused_kernel, batch_block, N, heads, matmul_dtype)
    out2d, attn = pl.pallas_call(
        kernel,
        grid=(nb,),
        in_specs=in_specs,
        out_specs=out_specs,
        out_shape=out_shape,
        compiler_params=pltpu.CompilerParams(
            dimension_semantics=("parallel",),
            vmem_limit_bytes=48 * 1024 * 1024,   # explicit budget (v7x has 64 MiB physical)
        ),
    )(x2d, mask, *weights)

    out = out2d[:, :E_out].reshape(B, N, E_out)  # strip lane padding (free in wrapper)
    return [out, mask, attn]


# ----------------------------------------------------------------------------
# Parameter construction (deterministic, mirrors nn.Linear default init shapes;
# weights stored pre-transposed as (in, out) so y = x @ W + b).
# ----------------------------------------------------------------------------
def init_linear(key, in_dim, out_dim):
    k1, k2 = jax.random.split(key)
    bound = 1.0 / math.sqrt(in_dim)
    w = jax.random.uniform(k1, (in_dim, out_dim), jnp.float32, -bound, bound)
    b = jax.random.uniform(k2, (1, out_dim), jnp.float32, -bound, bound)
    return w, b


def init_gat_layer(key, input_size, embed_size, num_head):
    head_size = embed_size // num_head
    all_head = num_head * head_size
    keys = jax.random.split(key, 6)
    w1, b1 = init_linear(keys[0], input_size, 128)
    w2, b2 = init_linear(keys[1], 128, embed_size)
    wq, bq = init_linear(keys[2], embed_size, all_head)
    wk, bk = init_linear(keys[3], embed_size, all_head)
    wv, bv = init_linear(keys[4], embed_size, all_head)
    wd, bd = init_linear(keys[5], embed_size, embed_size)
    return dict(w1=w1, b1=b1, w2=w2, b2=b2, wq=wq, bq=bq, wk=wk, bk=bk,
                wv=wv, bv=bv, wd=wd, bd=bd,
                num_heads=num_head, head_size=head_size)


def init_gat(key, num_of_layers, num_heads_per_layer, num_features_per_layer):
    assert num_of_layers == len(num_heads_per_layer) == len(num_features_per_layer) - 1
    num_heads_per_layer = [1] + list(num_heads_per_layer)
    layers = []
    keys = jax.random.split(key, num_of_layers)
    for i in range(num_of_layers):
        layers.append(init_gat_layer(keys[i],
                                     input_size=num_features_per_layer[i],
                                     embed_size=num_features_per_layer[i + 1],
                                     num_head=num_heads_per_layer[i + 1]))
    return layers


# ----------------------------------------------------------------------------
# Pure-JAX reference (correctness sanity check, mirrors the torch math exactly).
# ----------------------------------------------------------------------------
def gat_layer_ref(params, x, mask):
    H, D = params["num_heads"], params["head_size"]
    B, N, _ = x.shape
    h = jax.nn.relu(x @ params["w1"] + params["b1"])
    e = jax.nn.relu(h @ params["w2"] + params["b2"])
    q = e @ params["wq"] + params["bq"]
    k = e @ params["wk"] + params["bk"]
    v = e @ params["wv"] + params["bv"]
    split = lambda t: t.reshape(B, N, H, D).transpose(0, 2, 1, 3)
    qh, kh, vh = split(q), split(k), split(v)
    s = jnp.einsum("bhqd,bhkd->bhqk", qh, kh) / math.sqrt(D)
    s = jnp.where(mask[:, None, :, :] < 0.1, -1.0e10, s)
    p = jax.nn.softmax(s, axis=-1)
    ctx = jnp.einsum("bhqk,bhkd->bhqd", p, vh).transpose(0, 2, 1, 3).reshape(B, N, H * D)
    out = ctx @ params["wd"] + params["bd"]
    attn = p.transpose(0, 2, 1, 3).sum(-2) / H
    return out, attn


def gat_forward_ref(layers, data, attn_mask):
    x, attn = data, None
    for params in layers:
        x, attn = gat_layer_ref(params, x, attn_mask)
    return [x, attn_mask, attn]


# ----------------------------------------------------------------------------
if __name__ == "__main__":
    key = jax.random.PRNGKey(0)
    k_param, k_x, k_m = jax.random.split(key, 3)

    # GAT(num_of_layers=2, num_heads_per_layer=[4,4], num_features_per_layer=[4,32,32])
    num_of_layers = 2
    num_heads_per_layer = [4, 4]
    num_features_per_layer = [4, 32, 32]
    layers = init_gat(k_param, num_of_layers, num_heads_per_layer, num_features_per_layer)

    B, N, F0 = 2, 8, num_features_per_layer[0]
    x = jax.random.normal(k_x, (B, N, F0), jnp.float32)
    # 0/1 attention mask with the diagonal always visible.
    mask = (jax.random.uniform(k_m, (B, N, N)) > 0.4).astype(jnp.float32)
    mask = jnp.maximum(mask, jnp.eye(N, dtype=jnp.float32)[None])

    out, attn_mask_out, attn = gat_forward(layers, x, mask)
    jax.block_until_ready(out)
    jax.block_until_ready(attn)

    # Sanity check against pure-JAX reference. 1e-3 tolerance leaves margin for the
    # EUP approximate-reciprocal (+ Newton step) softmax denominator and the additive
    # (-1e10) mask bias vs. masked_fill_.
    out_ref, _, attn_ref = gat_forward_ref(layers, x, mask)
    assert jnp.allclose(out, out_ref, atol=1e-3, rtol=1e-3), \
        float(jnp.max(jnp.abs(out - out_ref)))
    assert jnp.allclose(attn, attn_ref, atol=1e-3, rtol=1e-3), \
        float(jnp.max(jnp.abs(attn - attn_ref)))

    print("KERNEL_OK")
</pallas_src>

<mosaic_0001>
module attributes {stable_mosaic.version = 11 : i64} {
  func.func @_gat_fused_kernel(%arg0: i32, %arg1: memref<16x4xf32, #tpu.memory_space<vmem>>, %arg2: memref<2x8x8xf32, #tpu.memory_space<vmem>>, %arg3: memref<4x128xf32, #tpu.memory_space<vmem>>, %arg4: memref<1x128xf32, #tpu.memory_space<vmem>>, %arg5: memref<128x32xf32, #tpu.memory_space<vmem>>, %arg6: memref<1x32xf32, #tpu.memory_space<vmem>>, %arg7: memref<32x32xf32, #tpu.memory_space<vmem>>, %arg8: memref<1x32xf32, #tpu.memory_space<vmem>>, %arg9: memref<32x32xf32, #tpu.memory_space<vmem>>, %arg10: memref<1x32xf32, #tpu.memory_space<vmem>>, %arg11: memref<32x32xf32, #tpu.memory_space<vmem>>, %arg12: memref<1x32xf32, #tpu.memory_space<vmem>>, %arg13: memref<32x32xf32, #tpu.memory_space<vmem>>, %arg14: memref<1x32xf32, #tpu.memory_space<vmem>>, %arg15: memref<32x32xf32, #tpu.memory_space<vmem>>, %arg16: memref<32x32xf32, #tpu.memory_space<vmem>>, %arg17: memref<32x128xf32, #tpu.memory_space<vmem>>, %arg18: memref<1x128xf32, #tpu.memory_space<vmem>>, %arg19: memref<128x32xf32, #tpu.memory_space<vmem>>, %arg20: memref<1x32xf32, #tpu.memory_space<vmem>>, %arg21: memref<32x32xf32, #tpu.memory_space<vmem>>, %arg22: memref<1x32xf32, #tpu.memory_space<vmem>>, %arg23: memref<32x32xf32, #tpu.memory_space<vmem>>, %arg24: memref<1x32xf32, #tpu.memory_space<vmem>>, %arg25: memref<32x32xf32, #tpu.memory_space<vmem>>, %arg26: memref<1x32xf32, #tpu.memory_space<vmem>>, %arg27: memref<32x128xf32, #tpu.memory_space<vmem>>, %arg28: memref<1x128xf32, #tpu.memory_space<vmem>>, %arg29: memref<32x32xf32, #tpu.memory_space<vmem>>, %arg30: memref<32x32xf32, #tpu.memory_space<vmem>>, %arg31: memref<16x128xf32, #tpu.memory_space<vmem>>, %arg32: memref<2x8x8xf32, #tpu.memory_space<vmem>>) attributes {dimension_semantics = [#tpu.dimension_semantics<parallel>], iteration_bounds = array<i64: 1>, scalar_prefetch = 0 : i64, scratch_operands = 0 : i64, tpu.core_type = #tpu.core_type<tc>, window_params = [{transform_indices = @transform_0, window_bounds = array<i64: 16, 4>}, {transform_indices = @transform_1, window_bounds = array<i64: 2, 8, 8>}, {pipeline_mode = #tpu.pipeline_mode<synchronous>, transform_indices = @transform_2, window_bounds = array<i64: 4, 128>}, {pipeline_mode = #tpu.pipeline_mode<synchronous>, transform_indices = @transform_3, window_bounds = array<i64: 1, 128>}, {pipeline_mode = #tpu.pipeline_mode<synchronous>, transform_indices = @transform_4, window_bounds = array<i64: 128, 32>}, {pipeline_mode = #tpu.pipeline_mode<synchronous>, transform_indices = @transform_5, window_bounds = array<i64: 1, 32>}, {pipeline_mode = #tpu.pipeline_mode<synchronous>, transform_indices = @transform_6, window_bounds = array<i64: 32, 32>}, {pipeline_mode = #tpu.pipeline_mode<synchronous>, transform_indices = @transform_7, window_bounds = array<i64: 1, 32>}, {pipeline_mode = #tpu.pipeline_mode<synchronous>, transform_indices = @transform_8, window_bounds = array<i64: 32, 32>}, {pipeline_mode = #tpu.pipeline_mode<synchronous>, transform_indices = @transform_9, window_bounds = array<i64: 1, 32>}, {pipeline_mode = #tpu.pipeline_mode<synchronous>, transform_indices = @transform_10, window_bounds = array<i64: 32, 32>}, {pipeline_mode = #tpu.pipeline_mode<synchronous>, transform_indices = @transform_11, window_bounds = array<i64: 1, 32>}, {pipeline_mode = #tpu.pipeline_mode<synchronous>, transform_indices = @transform_12, window_bounds = array<i64: 32, 32>}, {pipeline_mode = #tpu.pipeline_mode<synchronous>, transform_indices = @transform_13, window_bounds = array<i64: 1, 32>}, {pipeline_mode = #tpu.pipeline_mode<synchronous>, transform_indices = @transform_14, window_bounds = array<i64: 32, 32>}, {pipeline_mode = #tpu.pipeline_mode<synchronous>, transform_indices = @transform_15, window_bounds = array<i64: 32, 32>}, {pipeline_mode = #tpu.pipeline_mode<synchronous>, transform_indices = @transform_16, window_bounds = array<i64: 32, 128>}, {pipeline_mode = #tpu.pipeline_mode<synchronous>, transform_indices = @transform_17, window_bounds = array<i64: 1, 128>}, {pipeline_mode = #tpu.pipeline_mode<synchronous>, transform_indices = @transform_18, window_bounds = array<i64: 128, 32>}, {pipeline_mode = #tpu.pipeline_mode<synchronous>, transform_indices = @transform_19, window_bounds = array<i64: 1, 32>}, {pipeline_mode = #tpu.pipeline_mode<synchronous>, transform_indices = @transform_20, window_bounds = array<i64: 32, 32>}, {pipeline_mode = #tpu.pipeline_mode<synchronous>, transform_indices = @transform_21, window_bounds = array<i64: 1, 32>}, {pipeline_mode = #tpu.pipeline_mode<synchronous>, transform_indices = @transform_22, window_bounds = array<i64: 32, 32>}, {pipeline_mode = #tpu.pipeline_mode<synchronous>, transform_indices = @transform_23, window_bounds = array<i64: 1, 32>}, {pipeline_mode = #tpu.pipeline_mode<synchronous>, transform_indices = @transform_24, window_bounds = array<i64: 32, 32>}, {pipeline_mode = #tpu.pipeline_mode<synchronous>, transform_indices = @transform_25, window_bounds = array<i64: 1, 32>}, {pipeline_mode = #tpu.pipeline_mode<synchronous>, transform_indices = @transform_26, window_bounds = array<i64: 32, 128>}, {pipeline_mode = #tpu.pipeline_mode<synchronous>, transform_indices = @transform_27, window_bounds = array<i64: 1, 128>}, {pipeline_mode = #tpu.pipeline_mode<synchronous>, transform_indices = @transform_28, window_bounds = array<i64: 32, 32>}, {pipeline_mode = #tpu.pipeline_mode<synchronous>, transform_indices = @transform_29, window_bounds = array<i64: 32, 32>}, {transform_indices = @transform_30, window_bounds = array<i64: 16, 128>}, {transform_indices = @transform_31, window_bounds = array<i64: 2, 8, 8>}]} {
    %c0 = arith.constant 0 : index
    %c0_0 = arith.constant 0 : index
    %c0_1 = arith.constant 0 : index
    %0 = vector.load %arg2[%c0, %c0_0, %c0_1] : memref<2x8x8xf32, #tpu.memory_space<vmem>>, vector<2x8x8xf32>
    %cst = arith.constant 1.000000e-01 : f32
    %1 = vector.broadcast %cst : f32 to vector<2x8x8xf32>
    %2 = arith.cmpf olt, %0, %1 : vector<2x8x8xf32>
    %cst_2 = arith.constant -1.000000e+10 : f32
    %cst_3 = arith.constant 0.000000e+00 : f32
    %3 = vector.broadcast %cst_2 : f32 to vector<2x8x8xf32>
    %4 = vector.broadcast %cst_3 : f32 to vector<2x8x8xf32>
    %5 = arith.select %2, %3, %4 : vector<2x8x8xi1>, vector<2x8x8xf32>
    %c0_4 = arith.constant 0 : index
    %c0_5 = arith.constant 0 : index
    %6 = vector.load %arg1[%c0_4, %c0_5] : memref<16x4xf32, #tpu.memory_space<vmem>>, vector<16x4xf32>
    %c0_6 = arith.constant 0 : index
    %c0_7 = arith.constant 0 : index
    %7 = vector.load %arg3[%c0_6, %c0_7] : memref<4x128xf32, #tpu.memory_space<vmem>>, vector<4x128xf32>
    %cst_8 = arith.constant dense<0.000000e+00> : vector<16x128xf32>
    %8 = tpu.matmul %6, %7, %cst_8 {dimension_numbers = #tpu.dot_dimension_numbers<[1], [0], [0], [1], [0, 0, 1, 1], [], []>} : vector<16x4xf32>, vector<4x128xf32>, vector<16x128xf32> -> vector<16x128xf32>
    %c0_9 = arith.constant 0 : index
    %c0_10 = arith.constant 0 : index
    %9 = vector.load %arg4[%c0_9, %c0_10] : memref<1x128xf32, #tpu.memory_space<vmem>>, vector<1x128xf32>
    %10 = vector.broadcast %9 : vector<1x128xf32> to vector<16x128xf32>
    %11 = arith.addf %8, %10 : vector<16x128xf32>
    %cst_11 = arith.constant 0.000000e+00 : f32
    %12 = vector.broadcast %cst_11 : f32 to vector<16x128xf32>
    %13 = arith.maximumf %11, %12 : vector<16x128xf32>
    %c0_12 = arith.constant 0 : index
    %c0_13 = arith.constant 0 : index
    %14 = vector.load %arg5[%c0_12, %c0_13] : memref<128x32xf32, #tpu.memory_space<vmem>>, vector<128x32xf32>
    %cst_14 = arith.constant dense<0.000000e+00> : vector<16x32xf32>
    %15 = tpu.matmul %13, %14, %cst_14 {dimension_numbers = #tpu.dot_dimension_numbers<[1], [0], [0], [1], [0, 0, 1, 1], [], []>} : vector<16x128xf32>, vector<128x32xf32>, vector<16x32xf32> -> vector<16x32xf32>
    %c0_15 = arith.constant 0 : index
    %c0_16 = arith.constant 0 : index
    %16 = vector.load %arg6[%c0_15, %c0_16] : memref<1x32xf32, #tpu.memory_space<vmem>>, vector<1x32xf32>
    %17 = vector.broadcast %16 : vector<1x32xf32> to vector<16x32xf32>
    %18 = arith.addf %15, %17 : vector<16x32xf32>
    %cst_17 = arith.constant 0.000000e+00 : f32
    %19 = vector.broadcast %cst_17 : f32 to vector<16x32xf32>
    %20 = arith.maximumf %18, %19 : vector<16x32xf32>
    %c0_18 = arith.constant 0 : index
    %c0_19 = arith.constant 0 : index
    %21 = vector.load %arg7[%c0_18, %c0_19] : memref<32x32xf32, #tpu.memory_space<vmem>>, vector<32x32xf32>
    %cst_20 = arith.constant dense<0.000000e+00> : vector<16x32xf32>
    %22 = tpu.matmul %20, %21, %cst_20 {dimension_numbers = #tpu.dot_dimension_numbers<[1], [0], [0], [1], [0, 0, 1, 1], [], []>} : vector<16x32xf32>, vector<32x32xf32>, vector<16x32xf32> -> vector<16x32xf32>
    %c0_21 = arith.constant 0 : index
    %c0_22 = arith.constant 0 : index
    %23 = vector.load %arg8[%c0_21, %c0_22] : memref<1x32xf32, #tpu.memory_space<vmem>>, vector<1x32xf32>
    %24 = vector.broadcast %23 : vector<1x32xf32> to vector<16x32xf32>
    %25 = arith.addf %22, %24 : vector<16x32xf32>
    %c0_23 = arith.constant 0 : index
    %c0_24 = arith.constant 0 : index
    %26 = vector.load %arg9[%c0_23, %c0_24] : memref<32x32xf32, #tpu.memory_space<vmem>>, vector<32x32xf32>
    %cst_25 = arith.constant dense<0.000000e+00> : vector<16x32xf32>
    %27 = tpu.matmul %20, %26, %cst_25 {dimension_numbers = #tpu.dot_dimension_numbers<[1], [0], [0], [1], [0, 0, 1, 1], [], []>} : vector<16x32xf32>, vector<32x32xf32>, vector<16x32xf32> -> vector<16x32xf32>
    %c0_26 = arith.constant 0 : index
    %c0_27 = arith.constant 0 : index
    %28 = vector.load %arg10[%c0_26, %c0_27] : memref<1x32xf32, #tpu.memory_space<vmem>>, vector<1x32xf32>
    %29 = vector.broadcast %28 : vector<1x32xf32> to vector<16x32xf32>
    %30 = arith.addf %27, %29 : vector<16x32xf32>
    %c0_28 = arith.constant 0 : index
    %c0_29 = arith.constant 0 : index
    %31 = vector.load %arg11[%c0_28, %c0_29] : memref<32x32xf32, #tpu.memory_space<vmem>>, vector<32x32xf32>
    %cst_30 = arith.constant dense<0.000000e+00> : vector<16x32xf32>
    %32 = tpu.matmul %20, %31, %cst_30 {dimension_numbers = #tpu.dot_dimension_numbers<[1], [0], [0], [1], [0, 0, 1, 1], [], []>} : vector<16x32xf32>, vector<32x32xf32>, vector<16x32xf32> -> vector<16x32xf32>
    %c0_31 = arith.constant 0 : index
    %c0_32 = arith.constant 0 : index
    %33 = vector.load %arg12[%c0_31, %c0_32] : memref<1x32xf32, #tpu.memory_space<vmem>>, vector<1x32xf32>
    %34 = vector.broadcast %33 : vector<1x32xf32> to vector<16x32xf32>
    %35 = arith.addf %32, %34 : vector<16x32xf32>
    %36 = vector.shape_cast %25 : vector<16x32xf32> to vector<2x8x32xf32>
    %37 = vector.shape_cast %30 : vector<16x32xf32> to vector<2x8x32xf32>
    %38 = vector.shape_cast %35 : vector<16x32xf32> to vector<2x8x32xf32>
    %39 = tpu.concatenate %5, %5, %5, %5 in 1 : vector<2x8x8xf32>, vector<2x8x8xf32>, vector<2x8x8xf32>, vector<2x8x8xf32> -> vector<2x32x8xf32>
    %40 = tpu.concatenate %36, %36, %36, %36 in 1 : vector<2x8x32xf32>, vector<2x8x32xf32>, vector<2x8x32xf32>, vector<2x8x32xf32> -> vector<2x32x32xf32>
    %c0_33 = arith.constant 0 : index
    %c0_34 = arith.constant 0 : index
    %41 = vector.load %arg15[%c0_33, %c0_34] : memref<32x32xf32, #tpu.memory_space<vmem>>, vector<32x32xf32>
    %42 = vector.shape_cast %41 : vector<32x32xf32> to vector<1x32x32xf32>
    %43 = vector.broadcast %42 : vector<1x32x32xf32> to vector<2x32x32xf32>
    %44 = arith.mulf %40, %43 : vector<2x32x32xf32>
    "tpu.trace_start"() <{level = 10 : i32, message = "bqd,bkd->bqk"}> : () -> ()
    %cst_35 = arith.constant dense<0.000000e+00> : vector<2x32x8xf32>
    %45 = tpu.matmul %44, %37, %cst_35 {dimension_numbers = #tpu.dot_dimension_numbers<[2], [2], [1], [1], [0, 0, 0, 1, 1, 1], [0], [0]>} : vector<2x32x32xf32>, vector<2x8x32xf32>, vector<2x32x8xf32> -> vector<2x32x8xf32>
    "tpu.trace_stop"() : () -> ()
    %46 = arith.addf %45, %39 : vector<2x32x8xf32>
    %cst_36 = arith.constant dense<0xFF800000> : vector<2x32xf32>
    %47 = vector.multi_reduction <maximumf>, %46, %cst_36 [2] : vector<2x32x8xf32> to vector<2x32xf32>
    %48 = vector.shape_cast %47 : vector<2x32xf32> to vector<2x32x1xf32>
    %49 = vector.broadcast %48 : vector<2x32x1xf32> to vector<2x32x8xf32>
    %50 = arith.subf %46, %49 : vector<2x32x8xf32>
    %51 = math.exp %50 : vector<2x32x8xf32>
    %cst_37 = arith.constant dense<0.000000e+00> : vector<2x32xf32>
    %52 = vector.multi_reduction <add>, %51, %cst_37 [2] : vector<2x32x8xf32> to vector<2x32xf32>
    %53 = vector.shape_cast %52 : vector<2x32xf32> to vector<2x32x1xf32>
    %54 = tpu.reciprocal %53 {approx = true} : vector<2x32x1xf32> -> vector<2x32x1xf32>
    %55 = arith.mulf %53, %54 : vector<2x32x1xf32>
    %cst_38 = arith.constant 2.000000e+00 : f32
    %56 = vector.broadcast %cst_38 : f32 to vector<2x32x1xf32>
    %57 = arith.subf %56, %55 : vector<2x32x1xf32>
    %58 = arith.mulf %54, %57 : vector<2x32x1xf32>
    %59 = vector.broadcast %58 : vector<2x32x1xf32> to vector<2x32x8xf32>
    %60 = arith.mulf %51, %59 : vector<2x32x8xf32>
    "tpu.trace_start"() <{level = 10 : i32, message = "bqk,bkd->bqd"}> : () -> ()
    %cst_39 = arith.constant dense<0.000000e+00> : vector<2x32x32xf32>
    %61 = tpu.matmul %60, %38, %cst_39 {dimension_numbers = #tpu.dot_dimension_numbers<[2], [1], [1], [2], [0, 0, 0, 1, 1, 2], [0], [0]>} : vector<2x32x8xf32>, vector<2x8x32xf32>, vector<2x32x32xf32> -> vector<2x32x32xf32>
    "tpu.trace_stop"() : () -> ()
    %c0_40 = arith.constant 0 : index
    %c0_41 = arith.constant 0 : index
    %62 = vector.load %arg16[%c0_40, %c0_41] : memref<32x32xf32, #tpu.memory_space<vmem>>, vector<32x32xf32>
    %63 = vector.shape_cast %62 : vector<32x32xf32> to vector<1x32x32xf32>
    %64 = vector.broadcast %63 : vector<1x32x32xf32> to vector<2x32x32xf32>
    %65 = arith.mulf %61, %64 : vector<2x32x32xf32>
    %66 = vector.extract_strided_slice %65 {offsets = [0, 0, 0], sizes = [2, 8, 32], strides = [1, 1, 1]} : vector<2x32x32xf32> to vector<2x8x32xf32>
    %67 = vector.extract_strided_slice %65 {offsets = [0, 8, 0], sizes = [2, 8, 32], strides = [1, 1, 1]} : vector<2x32x32xf32> to vector<2x8x32xf32>
    %68 = arith.addf %66, %67 : vector<2x8x32xf32>
    %69 = vector.extract_strided_slice %65 {offsets = [0, 16, 0], sizes = [2, 8, 32], strides = [1, 1, 1]} : vector<2x32x32xf32> to vector<2x8x32xf32>
    %70 = arith.addf %68, %69 : vector<2x8x32xf32>
    %71 = vector.extract_strided_slice %65 {offsets = [0, 24, 0], sizes = [2, 8, 32], strides = [1, 1, 1]} : vector<2x32x32xf32> to vector<2x8x32xf32>
    %72 = arith.addf %70, %71 : vector<2x8x32xf32>
    %73 = vector.shape_cast %72 : vector<2x8x32xf32> to vector<16x32xf32>
    %c0_42 = arith.constant 0 : index
    %c0_43 = arith.constant 0 : index
    %74 = vector.load %arg13[%c0_42, %c0_43] : memref<32x32xf32, #tpu.memory_space<vmem>>, vector<32x32xf32>
    %cst_44 = arith.constant dense<0.000000e+00> : vector<16x32xf32>
    %75 = tpu.matmul %73, %74, %cst_44 {dimension_numbers = #tpu.dot_dimension_numbers<[1], [0], [0], [1], [0, 0, 1, 1], [], []>} : vector<16x32xf32>, vector<32x32xf32>, vector<16x32xf32> -> vector<16x32xf32>
    %c0_45 = arith.constant 0 : index
    %c0_46 = arith.constant 0 : index
    %76 = vector.load %arg14[%c0_45, %c0_46] : memref<1x32xf32, #tpu.memory_space<vmem>>, vector<1x32xf32>
    %77 = vector.broadcast %76 : vector<1x32xf32> to vector<16x32xf32>
    %78 = arith.addf %75, %77 : vector<16x32xf32>
    %c0_47 = arith.constant 0 : index
    %c0_48 = arith.constant 0 : index
    %79 = vector.load %arg17[%c0_47, %c0_48] : memref<32x128xf32, #tpu.memory_space<vmem>>, vector<32x128xf32>
    %cst_49 = arith.constant dense<0.000000e+00> : vector<16x128xf32>
    %80 = tpu.matmul %78, %79, %cst_49 {dimension_numbers = #tpu.dot_dimension_numbers<[1], [0], [0], [1], [0, 0, 1, 1], [], []>} : vector<16x32xf32>, vector<32x128xf32>, vector<16x128xf32> -> vector<16x128xf32>
    %c0_50 = arith.constant 0 : index
    %c0_51 = arith.constant 0 : index
    %81 = vector.load %arg18[%c0_50, %c0_51] : memref<1x128xf32, #tpu.memory_space<vmem>>, vector<1x128xf32>
    %82 = vector.broadcast %81 : vector<1x128xf32> to vector<16x128xf32>
    %83 = arith.addf %80, %82 : vector<16x128xf32>
    %cst_52 = arith.constant 0.000000e+00 : f32
    %84 = vector.broadcast %cst_52 : f32 to vector<16x128xf32>
    %85 = arith.maximumf %83, %84 : vector<16x128xf32>
    %c0_53 = arith.constant 0 : index
    %c0_54 = arith.constant 0 : index
    %86 = vector.load %arg19[%c0_53, %c0_54] : memref<128x32xf32, #tpu.memory_space<vmem>>, vector<128x32xf32>
    %cst_55 = arith.constant dense<0.000000e+00> : vector<16x32xf32>
    %87 = tpu.matmul %85, %86, %cst_55 {dimension_numbers = #tpu.dot_dimension_numbers<[1], [0], [0], [1], [0, 0, 1, 1], [], []>} : vector<16x128xf32>, vector<128x32xf32>, vector<16x32xf32> -> vector<16x32xf32>
    %c0_56 = arith.constant 0 : index
    %c0_57 = arith.constant 0 : index
    %88 = vector.load %arg20[%c0_56, %c0_57] : memref<1x32xf32, #tpu.memory_space<vmem>>, vector<1x32xf32>
    %89 = vector.broadcast %88 : vector<1x32xf32> to vector<16x32xf32>
    %90 = arith.addf %87, %89 : vector<16x32xf32>
    %cst_58 = arith.constant 0.000000e+00 : f32
    %91 = vector.broadcast %cst_58 : f32 to vector<16x32xf32>
    %92 = arith.maximumf %90, %91 : vector<16x32xf32>
    %c0_59 = arith.constant 0 : index
    %c0_60 = arith.constant 0 : index
    %93 = vector.load %arg21[%c0_59, %c0_60] : memref<32x32xf32, #tpu.memory_space<vmem>>, vector<32x32xf32>
    %cst_61 = arith.constant dense<0.000000e+00> : vector<16x32xf32>
    %94 = tpu.matmul %92, %93, %cst_61 {dimension_numbers = #tpu.dot_dimension_numbers<[1], [0], [0], [1], [0, 0, 1, 1], [], []>} : vector<16x32xf32>, vector<32x32xf32>, vector<16x32xf32> -> vector<16x32xf32>
    %c0_62 = arith.constant 0 : index
    %c0_63 = arith.constant 0 : index
    %95 = vector.load %arg22[%c0_62, %c0_63] : memref<1x32xf32, #tpu.memory_space<vmem>>, vector<1x32xf32>
    %96 = vector.broadcast %95 : vector<1x32xf32> to vector<16x32xf32>
    %97 = arith.addf %94, %96 : vector<16x32xf32>
    %c0_64 = arith.constant 0 : index
    %c0_65 = arith.constant 0 : index
    %98 = vector.load %arg23[%c0_64, %c0_65] : memref<32x32xf32, #tpu.memory_space<vmem>>, vector<32x32xf32>
    %cst_66 = arith.constant dense<0.000000e+00> : vector<16x32xf32>
    %99 = tpu.matmul %92, %98, %cst_66 {dimension_numbers = #tpu.dot_dimension_numbers<[1], [0], [0], [1], [0, 0, 1, 1], [], []>} : vector<16x32xf32>, vector<32x32xf32>, vector<16x32xf32> -> vector<16x32xf32>
    %c0_67 = arith.constant 0 : index
    %c0_68 = arith.constant 0 : index
    %100 = vector.load %arg24[%c0_67, %c0_68] : memref<1x32xf32, #tpu.memory_space<vmem>>, vector<1x32xf32>
    %101 = vector.broadcast %100 : vector<1x32xf32> to vector<16x32xf32>
    %102 = arith.addf %99, %101 : vector<16x32xf32>
    %c0_69 = arith.constant 0 : index
    %c0_70 = arith.constant 0 : index
    %103 = vector.load %arg25[%c0_69, %c0_70] : memref<32x32xf32, #tpu.memory_space<vmem>>, vector<32x32xf32>
    %cst_71 = arith.constant dense<0.000000e+00> : vector<16x32xf32>
    %104 = tpu.matmul %92, %103, %cst_71 {dimension_numbers = #tpu.dot_dimension_numbers<[1], [0], [0], [1], [0, 0, 1, 1], [], []>} : vector<16x32xf32>, vector<32x32xf32>, vector<16x32xf32> -> vector<16x32xf32>
    %c0_72 = arith.constant 0 : index
    %c0_73 = arith.constant 0 : index
    %105 = vector.load %arg26[%c0_72, %c0_73] : memref<1x32xf32, #tpu.memory_space<vmem>>, vector<1x32xf32>
    %106 = vector.broadcast %105 : vector<1x32xf32> to vector<16x32xf32>
    %107 = arith.addf %104, %106 : vector<16x32xf32>
    %108 = vector.shape_cast %97 : vector<16x32xf32> to vector<2x8x32xf32>
    %109 = vector.shape_cast %102 : vector<16x32xf32> to vector<2x8x32xf32>
    %110 = vector.shape_cast %107 : vector<16x32xf32> to vector<2x8x32xf32>
    %111 = tpu.concatenate %108, %108, %108, %108 in 1 : vector<2x8x32xf32>, vector<2x8x32xf32>, vector<2x8x32xf32>, vector<2x8x32xf32> -> vector<2x32x32xf32>
    %c0_74 = arith.constant 0 : index
    %c0_75 = arith.constant 0 : index
    %112 = vector.load %arg29[%c0_74, %c0_75] : memref<32x32xf32, #tpu.memory_space<vmem>>, vector<32x32xf32>
    %113 = vector.shape_cast %112 : vector<32x32xf32> to vector<1x32x32xf32>
    %114 = vector.broadcast %113 : vector<1x32x32xf32> to vector<2x32x32xf32>
    %115 = arith.mulf %111, %114 : vector<2x32x32xf32>
    "tpu.trace_start"() <{level = 10 : i32, message = "bqd,bkd->bqk"}> : () -> ()
    %cst_76 = arith.constant dense<0.000000e+00> : vector<2x32x8xf32>
    %116 = tpu.matmul %115, %109, %cst_76 {dimension_numbers = #tpu.dot_dimension_numbers<[2], [2], [1], [1], [0, 0, 0, 1, 1, 1], [0], [0]>} : vector<2x32x32xf32>, vector<2x8x32xf32>, vector<2x32x8xf32> -> vector<2x32x8xf32>
    "tpu.trace_stop"() : () -> ()
    %117 = arith.addf %116, %39 : vector<2x32x8xf32>
    %cst_77 = arith.constant dense<0xFF800000> : vector<2x32xf32>
    %118 = vector.multi_reduction <maximumf>, %117, %cst_77 [2] : vector<2x32x8xf32> to vector<2x32xf32>
    %119 = vector.shape_cast %118 : vector<2x32xf32> to vector<2x32x1xf32>
    %120 = vector.broadcast %119 : vector<2x32x1xf32> to vector<2x32x8xf32>
    %121 = arith.subf %117, %120 : vector<2x32x8xf32>
    %122 = math.exp %121 : vector<2x32x8xf32>
    %cst_78 = arith.constant dense<0.000000e+00> : vector<2x32xf32>
    %123 = vector.multi_reduction <add>, %122, %cst_78 [2] : vector<2x32x8xf32> to vector<2x32xf32>
    %124 = vector.shape_cast %123 : vector<2x32xf32> to vector<2x32x1xf32>
    %125 = tpu.reciprocal %124 {approx = true} : vector<2x32x1xf32> -> vector<2x32x1xf32>
    %126 = arith.mulf %124, %125 : vector<2x32x1xf32>
    %cst_79 = arith.constant 2.000000e+00 : f32
    %127 = vector.broadcast %cst_79 : f32 to vector<2x32x1xf32>
    %128 = arith.subf %127, %126 : vector<2x32x1xf32>
    %129 = arith.mulf %125, %128 : vector<2x32x1xf32>
    %130 = vector.broadcast %129 : vector<2x32x1xf32> to vector<2x32x8xf32>
    %131 = arith.mulf %122, %130 : vector<2x32x8xf32>
    "tpu.trace_start"() <{level = 10 : i32, message = "bqk,bkd->bqd"}> : () -> ()
    %cst_80 = arith.constant dense<0.000000e+00> : vector<2x32x32xf32>
    %132 = tpu.matmul %131, %110, %cst_80 {dimension_numbers = #tpu.dot_dimension_numbers<[2], [1], [1], [2], [0, 0, 0, 1, 1, 2], [0], [0]>} : vector<2x32x8xf32>, vector<2x8x32xf32>, vector<2x32x32xf32> -> vector<2x32x32xf32>
    "tpu.trace_stop"() : () -> ()
    %c0_81 = arith.constant 0 : index
    %c0_82 = arith.constant 0 : index
    %133 = vector.load %arg30[%c0_81, %c0_82] : memref<32x32xf32, #tpu.memory_space<vmem>>, vector<32x32xf32>
    %134 = vector.shape_cast %133 : vector<32x32xf32> to vector<1x32x32xf32>
    %135 = vector.broadcast %134 : vector<1x32x32xf32> to vector<2x32x32xf32>
    %136 = arith.mulf %132, %135 : vector<2x32x32xf32>
    %137 = vector.extract_strided_slice %136 {offsets = [0, 0, 0], sizes = [2, 8, 32], strides = [1, 1, 1]} : vector<2x32x32xf32> to vector<2x8x32xf32>
    %138 = vector.extract_strided_slice %131 {offsets = [0, 0, 0], sizes = [2, 8, 8], strides = [1, 1, 1]} : vector<2x32x8xf32> to vector<2x8x8xf32>
    %139 = vector.extract_strided_slice %136 {offsets = [0, 8, 0], sizes = [2, 8, 32], strides = [1, 1, 1]} : vector<2x32x32xf32> to vector<2x8x32xf32>
    %140 = arith.addf %137, %139 : vector<2x8x32xf32>
    %141 = vector.extract_strided_slice %131 {offsets = [0, 8, 0], sizes = [2, 8, 8], strides = [1, 1, 1]} : vector<2x32x8xf32> to vector<2x8x8xf32>
    %142 = arith.addf %138, %141 : vector<2x8x8xf32>
    %143 = vector.extract_strided_slice %136 {offsets = [0, 16, 0], sizes = [2, 8, 32], strides = [1, 1, 1]} : vector<2x32x32xf32> to vector<2x8x32xf32>
    %144 = arith.addf %140, %143 : vector<2x8x32xf32>
    %145 = vector.extract_strided_slice %131 {offsets = [0, 16, 0], sizes = [2, 8, 8], strides = [1, 1, 1]} : vector<2x32x8xf32> to vector<2x8x8xf32>
    %146 = arith.addf %142, %145 : vector<2x8x8xf32>
    %147 = vector.extract_strided_slice %136 {offsets = [0, 24, 0], sizes = [2, 8, 32], strides = [1, 1, 1]} : vector<2x32x32xf32> to vector<2x8x32xf32>
    %148 = arith.addf %144, %147 : vector<2x8x32xf32>
    %149 = vector.extract_strided_slice %131 {offsets = [0, 24, 0], sizes = [2, 8, 8], strides = [1, 1, 1]} : vector<2x32x8xf32> to vector<2x8x8xf32>
    %150 = arith.addf %146, %149 : vector<2x8x8xf32>
    %151 = vector.shape_cast %148 : vector<2x8x32xf32> to vector<16x32xf32>
    %c0_83 = arith.constant 0 : index
    %c0_84 = arith.constant 0 : index
    %152 = vector.load %arg27[%c0_83, %c0_84] : memref<32x128xf32, #tpu.memory_space<vmem>>, vector<32x128xf32>
    %cst_85 = arith.constant dense<0.000000e+00> : vector<16x128xf32>
    %153 = tpu.matmul %151, %152, %cst_85 {dimension_numbers = #tpu.dot_dimension_numbers<[1], [0], [0], [1], [0, 0, 1, 1], [], []>} : vector<16x32xf32>, vector<32x128xf32>, vector<16x128xf32> -> vector<16x128xf32>
    %c0_86 = arith.constant 0 : index
    %c0_87 = arith.constant 0 : index
    %154 = vector.load %arg28[%c0_86, %c0_87] : memref<1x128xf32, #tpu.memory_space<vmem>>, vector<1x128xf32>
    %155 = vector.broadcast %154 : vector<1x128xf32> to vector<16x128xf32>
    %156 = arith.addf %153, %155 : vector<16x128xf32>
    %cst_88 = arith.constant 2.500000e-01 : f32
    %157 = vector.broadcast %cst_88 : f32 to vector<2x8x8xf32>
    %158 = arith.mulf %150, %157 : vector<2x8x8xf32>
    %c0_89 = arith.constant 0 : index
    %c0_90 = arith.constant 0 : index
    %159 = vector.load %arg31[%c0_89, %c0_90] : memref<16x128xf32, #tpu.memory_space<vmem>>, vector<16x128xf32>
    tpu.vector_store %arg31[%c0_89, %c0_90], %156 {strides = array<i32>} : memref<16x128xf32, #tpu.memory_space<vmem>>, vector<16x128xf32>,
    %c0_91 = arith.constant 0 : index
    %c0_92 = arith.constant 0 : index
    %c0_93 = arith.constant 0 : index
    %160 = vector.load %arg32[%c0_91, %c0_92, %c0_93] : memref<2x8x8xf32, #tpu.memory_space<vmem>>, vector<2x8x8xf32>
    tpu.vector_store %arg32[%c0_91, %c0_92, %c0_93], %158 {strides = array<i32>} : memref<2x8x8xf32, #tpu.memory_space<vmem>>, vector<2x8x8xf32>,
    return
  }
  func.func @transform_0(%arg0: i32) -> (i32, i32) {
    %c0_i32 = arith.constant 0 : i32
    %c0_i32_0 = arith.constant 0 : i32
    return %arg0, %c0_i32 : i32, i32
  }
  func.func @transform_1(%arg0: i32) -> (i32, i32, i32) {
    %c0_i32 = arith.constant 0 : i32
    %c0_i32_0 = arith.constant 0 : i32
    %c0_i32_1 = arith.constant 0 : i32
    return %arg0, %c0_i32, %c0_i32_0 : i32, i32, i32
  }
  func.func @transform_2(%arg0: i32) -> (i32, i32) {
    %c0_i32 = arith.constant 0 : i32
    %c0_i32_0 = arith.constant 0 : i32
    %c0_i32_1 = arith.constant 0 : i32
    return %c0_i32, %c0_i32_0 : i32, i32
  }
  func.func @transform_3(%arg0: i32) -> (i32, i32) {
    %c0_i32 = arith.constant 0 : i32
    %c0_i32_0 = arith.constant 0 : i32
    %c0_i32_1 = arith.constant 0 : i32
    return %c0_i32, %c0_i32_0 : i32, i32
  }
  func.func @transform_4(%arg0: i32) -> (i32, i32) {
    %c0_i32 = arith.constant 0 : i32
    %c0_i32_0 = arith.constant 0 : i32
    %c0_i32_1 = arith.constant 0 : i32
    return %c0_i32, %c0_i32_0 : i32, i32
  }
  func.func @transform_5(%arg0: i32) -> (i32, i32) {
    %c0_i32 = arith.constant 0 : i32
    %c0_i32_0 = arith.constant 0 : i32
    %c0_i32_1 = arith.constant 0 : i32
    return %c0_i32, %c0_i32_0 : i32, i32
  }
  func.func @transform_6(%arg0: i32) -> (i32, i32) {
    %c0_i32 = arith.constant 0 : i32
    %c0_i32_0 = arith.constant 0 : i32
    %c0_i32_1 = arith.constant 0 : i32
    return %c0_i32, %c0_i32_0 : i32, i32
  }
  func.func @transform_7(%arg0: i32) -> (i32, i32) {
    %c0_i32 = arith.constant 0 : i32
    %c0_i32_0 = arith.constant 0 : i32
    %c0_i32_1 = arith.constant 0 : i32
    return %c0_i32, %c0_i32_0 : i32, i32
  }
  func.func @transform_8(%arg0: i32) -> (i32, i32) {
    %c0_i32 = arith.constant 0 : i32
    %c0_i32_0 = arith.constant 0 : i32
    %c0_i32_1 = arith.constant 0 : i32
    return %c0_i32, %c0_i32_0 : i32, i32
  }
  func.func @transform_9(%arg0: i32) -> (i32, i32) {
    %c0_i32 = arith.constant 0 : i32
    %c0_i32_0 = arith.constant 0 : i32
    %c0_i32_1 = arith.constant 0 : i32
    return %c0_i32, %c0_i32_0 : i32, i32
  }
  func.func @transform_10(%arg0: i32) -> (i32, i32) {
    %c0_i32 = arith.constant 0 : i32
    %c0_i32_0 = arith.constant 0 : i32
    %c0_i32_1 = arith.constant 0 : i32
    return %c0_i32, %c0_i32_0 : i32, i32
  }
  func.func @transform_11(%arg0: i32) -> (i32, i32) {
    %c0_i32 = arith.constant 0 : i32
    %c0_i32_0 = arith.constant 0 : i32
    %c0_i32_1 = arith.constant 0 : i32
    return %c0_i32, %c0_i32_0 : i32, i32
  }
  func.func @transform_12(%arg0: i32) -> (i32, i32) {
    %c0_i32 = arith.constant 0 : i32
    %c0_i32_0 = arith.constant 0 : i32
    %c0_i32_1 = arith.constant 0 : i32
    return %c0_i32, %c0_i32_0 : i32, i32
  }
  func.func @transform_13(%arg0: i32) -> (i32, i32) {
    %c0_i32 = arith.constant 0 : i32
    %c0_i32_0 = arith.constant 0 : i32
    %c0_i32_1 = arith.constant 0 : i32
    return %c0_i32, %c0_i32_0 : i32, i32
  }
  func.func @transform_14(%arg0: i32) -> (i32, i32) {
    %c0_i32 = arith.constant 0 : i32
    %c0_i32_0 = arith.constant 0 : i32
    %c0_i32_1 = arith.constant 0 : i32
    return %c0_i32, %c0_i32_0 : i32, i32
  }
  func.func @transform_15(%arg0: i32) -> (i32, i32) {
    %c0_i32 = arith.constant 0 : i32
    %c0_i32_0 = arith.constant 0 : i32
    %c0_i32_1 = arith.constant 0 : i32
    return %c0_i32, %c0_i32_0 : i32, i32
  }
  func.func @transform_16(%arg0: i32) -> (i32, i32) {
    %c0_i32 = arith.constant 0 : i32
    %c0_i32_0 = arith.constant 0 : i32
    %c0_i32_1 = arith.constant 0 : i32
    return %c0_i32, %c0_i32_0 : i32, i32
  }
  func.func @transform_17(%arg0: i32) -> (i32, i32) {
    %c0_i32 = arith.constant 0 : i32
    %c0_i32_0 = arith.constant 0 : i32
    %c0_i32_1 = arith.constant 0 : i32
    return %c0_i32, %c0_i32_0 : i32, i32
  }
  func.func @transform_18(%arg0: i32) -> (i32, i32) {
    %c0_i32 = arith.constant 0 : i32
    %c0_i32_0 = arith.constant 0 : i32
    %c0_i32_1 = arith.constant 0 : i32
    return %c0_i32, %c0_i32_0 : i32, i32
  }
  func.func @transform_19(%arg0: i32) -> (i32, i32) {
    %c0_i32 = arith.constant 0 : i32
    %c0_i32_0 = arith.constant 0 : i32
    %c0_i32_1 = arith.constant 0 : i32
    return %c0_i32, %c0_i32_0 : i32, i32
  }
  func.func @transform_20(%arg0: i32) -> (i32, i32) {
    %c0_i32 = arith.constant 0 : i32
    %c0_i32_0 = arith.constant 0 : i32
    %c0_i32_1 = arith.constant 0 : i32
    return %c0_i32, %c0_i32_0 : i32, i32
  }
  func.func @transform_21(%arg0: i32) -> (i32, i32) {
    %c0_i32 = arith.constant 0 : i32
    %c0_i32_0 = arith.constant 0 : i32
    %c0_i32_1 = arith.constant 0 : i32
    return %c0_i32, %c0_i32_0 : i32, i32
  }
  func.func @transform_22(%arg0: i32) -> (i32, i32) {
    %c0_i32 = arith.constant 0 : i32
    %c0_i32_0 = arith.constant 0 : i32
    %c0_i32_1 = arith.constant 0 : i32
    return %c0_i32, %c0_i32_0 : i32, i32
  }
  func.func @transform_23(%arg0: i32) -> (i32, i32) {
    %c0_i32 = arith.constant 0 : i32
    %c0_i32_0 = arith.constant 0 : i32
    %c0_i32_1 = arith.constant 0 : i32
    return %c0_i32, %c0_i32_0 : i32, i32
  }
  func.func @transform_24(%arg0: i32) -> (i32, i32) {
    %c0_i32 = arith.constant 0 : i32
    %c0_i32_0 = arith.constant 0 : i32
    %c0_i32_1 = arith.constant 0 : i32
    return %c0_i32, %c0_i32_0 : i32, i32
  }
  func.func @transform_25(%arg0: i32) -> (i32, i32) {
    %c0_i32 = arith.constant 0 : i32
    %c0_i32_0 = arith.constant 0 : i32
    %c0_i32_1 = arith.constant 0 : i32
    return %c0_i32, %c0_i32_0 : i32, i32
  }
  func.func @transform_26(%arg0: i32) -> (i32, i32) {
    %c0_i32 = arith.constant 0 : i32
    %c0_i32_0 = arith.constant 0 : i32
    %c0_i32_1 = arith.constant 0 : i32
    return %c0_i32, %c0_i32_0 : i32, i32
  }
  func.func @transform_27(%arg0: i32) -> (i32, i32) {
    %c0_i32 = arith.constant 0 : i32
    %c0_i32_0 = arith.constant 0 : i32
    %c0_i32_1 = arith.constant 0 : i32
    return %c0_i32, %c0_i32_0 : i32, i32
  }
  func.func @transform_28(%arg0: i32) -> (i32, i32) {
    %c0_i32 = arith.constant 0 : i32
    %c0_i32_0 = arith.constant 0 : i32
    %c0_i32_1 = arith.constant 0 : i32
    return %c0_i32, %c0_i32_0 : i32, i32
  }
  func.func @transform_29(%arg0: i32) -> (i32, i32) {
    %c0_i32 = arith.constant 0 : i32
    %c0_i32_0 = arith.constant 0 : i32
    %c0_i32_1 = arith.constant 0 : i32
    return %c0_i32, %c0_i32_0 : i32, i32
  }
  func.func @transform_30(%arg0: i32) -> (i32, i32) {
    %c0_i32 = arith.constant 0 : i32
    %c0_i32_0 = arith.constant 0 : i32
    return %arg0, %c0_i32 : i32, i32
  }
  func.func @transform_31(%arg0: i32) -> (i32, i32, i32) {
    %c0_i32 = arith.constant 0 : i32
    %c0_i32_0 = arith.constant 0 : i32
    %c0_i32_1 = arith.constant 0 : i32
    return %arg0, %c0_i32, %c0_i32_0 : i32, i32, i32
  }
}

</mosaic_0001>

<llo_original>
// kernel: tpu_custom_call.1
$region0: #{tpu_custom_call.1}
  #allocation0 [shape = 'u32[]', space=smem, size = 0x4, offset = 0x4, fixed_abs, tag = 'smem constant byte address 0x4 - core index']
  #allocation1 [shape = 'u32[72,128]{1,0:T(1,128)}', space=vmem, size = 0x9000, scoped, tag = 'internal scratch']
  %s0 = inlined_call_operand.smem [shape: u32[32], index: -1, kind: input, shape index: {}]
  %s1 = sld [smem:[%s0]]
  %s2 = scalar_lea.smem %s0, 1
  %s3 = sld [smem:[%s2]]
  %s4 = scalar_lea.smem %s0, 2
  %s5 = sld [smem:[%s4]]
  %s6 = scalar_lea.smem %s0, 3
  %s7 = sld [smem:[%s6]]
  %s8 = scalar_lea.smem %s0, 4
  %s9 = sld [smem:[%s8]]
  %s10 = scalar_lea.smem %s0, 5
  %s11 = sld [smem:[%s10]]
  %s12 = scalar_lea.smem %s0, 6
  %s13 = sld [smem:[%s12]]
  %s14 = scalar_lea.smem %s0, 7
  %s15 = sld [smem:[%s14]]
  %s16 = scalar_lea.smem %s0, 8
  %s17 = sld [smem:[%s16]]
  %s18 = scalar_lea.smem %s0, 9
  %s19 = sld [smem:[%s18]]
  %s20 = scalar_lea.smem %s0, 10
  %s21 = sld [smem:[%s20]]
  %s22 = scalar_lea.smem %s0, 11
  %s23 = sld [smem:[%s22]]
  %s24 = scalar_lea.smem %s0, 12
  %s25 = sld [smem:[%s24]]
  %s26 = scalar_lea.smem %s0, 13
  %s27 = sld [smem:[%s26]]
  %s28 = scalar_lea.smem %s0, 14
  %s29 = sld [smem:[%s28]]
  %s30 = scalar_lea.smem %s0, 15
  %s31 = sld [smem:[%s30]]
  %s32 = scalar_lea.smem %s0, 16
  %s33 = sld [smem:[%s32]]
  %s34 = scalar_lea.smem %s0, 17
  %s35 = sld [smem:[%s34]]
  %s36 = scalar_lea.smem %s0, 18
  %s37 = sld [smem:[%s36]]
  %s38 = scalar_lea.smem %s0, 19
  %s39 = sld [smem:[%s38]]
  %s40 = scalar_lea.smem %s0, 20
  %s41 = sld [smem:[%s40]]
  %s42 = scalar_lea.smem %s0, 21
  %s43 = sld [smem:[%s42]]
  %s44 = scalar_lea.smem %s0, 22
  %s45 = sld [smem:[%s44]]
  %s46 = scalar_lea.smem %s0, 23
  %s47 = sld [smem:[%s46]]
  %s48 = scalar_lea.smem %s0, 24
  %s49 = sld [smem:[%s48]]
  %s50 = scalar_lea.smem %s0, 25
  %s51 = sld [smem:[%s50]]
  %s52 = scalar_lea.smem %s0, 26
  %s53 = sld [smem:[%s52]]
  %s54 = scalar_lea.smem %s0, 27
  %s55 = sld [smem:[%s54]]
  %s56 = scalar_lea.smem %s0, 28
  %s57 = sld [smem:[%s56]]
  %s58 = scalar_lea.smem %s0, 29
  %s59 = sld [smem:[%s58]]
  %s60 = scalar_lea.smem %s0, 30
  %s61 = sld [smem:[%s60]]
  %s62 = scalar_lea.smem %s0, 31
  %s63 = sld [smem:[%s62]]
  %64 = xla_tuple %s61, %s63
  %s65 = sld [smem:[#allocation0]]
  $region178: #{tpu_custom_call.1} parent=0
    _
  %s67 = ssub.s32 1, %s65
  %s68 = scalar_select 0, %s67, %s65
  $region1: #{tpu_custom_call.1} parent=0
    #allocation2 [shape = 'u8[8192]{0}', space=vmem, size = 0x2000, scoped, tag = 'input window, operand 1, single buffered']
    #allocation3 [shape = 's32[1]{0}', space=sflag, size = 0x4, scoped, tag = 'scoped memory for tpu_custom_call.1']
    #allocation4 [shape = 's32[1]{0}', space=sflag, size = 0x4, scoped, tag = 'scoped memory for tpu_custom_call.1']
    #allocation5 [shape = 'u8[2048]{0}', space=vmem, size = 0x800, scoped, tag = 'input window, operand 2, single buffered']
    #allocation6 [shape = 's32[1]{0}', space=sflag, size = 0x4, scoped, tag = 'scoped memory for tpu_custom_call.1']
    #allocation7 [shape = 'u8[512]{0}', space=vmem, size = 0x400, scoped, tag = 'input window, operand 9, single buffered']
    #allocation8 [shape = 'u8[512]{0}', space=vmem, size = 0x400, scoped, tag = 'input window, operand 11, single buffered']
    #allocation9 [shape = 's32[1]{0}', space=sflag, size = 0x4, scoped, tag = 'scoped memory for tpu_custom_call.1']
    #allocation10 [shape = 'u8[512]{0}', space=vmem, size = 0x400, scoped, tag = 'input window, operand 13, single buffered']
    #allocation11 [shape = 'u8[512]{0}', space=vmem, size = 0x400, scoped, tag = 'input window, operand 17, single buffered']
    #allocation12 [shape = 's32[1]{0}', space=sflag, size = 0x4, scoped, tag = 'scoped memory for tpu_custom_call.1']
    #allocation13 [shape = 'u8[512]{0}', space=vmem, size = 0x400, scoped, tag = 'input window, operand 19, single buffered']
    #allocation14 [shape = 'u8[16384]{0}', space=vmem, size = 0x4000, scoped, tag = 'input window, operand 26, single buffered']
    #allocation15 [shape = 's32[1]{0}', space=sflag, size = 0x4, scoped, tag = 'scoped memory for tpu_custom_call.1']
    #allocation16 [shape = 'u8[16384]{0}', space=vmem, size = 0x4000, scoped, tag = 'input window, operand 28, single buffered']
    #allocation17 [shape = 'u8[16384]{0}', space=vmem, size = 0x4000, scoped, tag = 'input window, operand 29, single buffered']
    #allocation18 [shape = 's32[1]{0}', space=sflag, size = 0x4, scoped, tag = 'scoped memory for tpu_custom_call.1']
    #allocation19 [shape = 'u8[8192]{0}', space=vmem, size = 0x2000, scoped, tag = 'output window, operand 0, single buffered']
    #allocation20 [shape = 'u8[8192]{0}', space=vmem, size = 0x2000, scoped, tag = 'output window, operand 1, single buffered']
    #allocation21 [shape = 's32[1]{0}', space=sflag, size = 0x4, scoped, tag = 'scoped memory for tpu_custom_call.1']
    %69 = vsyncpa [#allocation3], 0
    %70 = vsyncpa [#allocation6], 0
    %71 = vsyncpa [#allocation9], 0
    %72 = vsyncpa [#allocation12], 0
    %73 = vsyncpa [#allocation15], 0
    %74 = vsyncpa [#allocation18], 0
    %75 = vsyncpa [#allocation4], 0
    %76 = vsyncpa [#allocation21], 0
    // Predicated region
    $region2: #{tpu_custom_call.1} parent=1 // pred_check
      _
    $region3: #{tpu_custom_call.1} parent=1 // pred_check_branch
      %78 = sbr.rel (0) target = $region5
    $region4: #{tpu_custom_call.1} parent=1 // pred_region
      _
    $region5: #{tpu_custom_call.1} parent=1 // pred_fallthru
      _
    // Predicated region
    $region6: #{tpu_custom_call.1} parent=1 // pred_check
      _
    $region7: #{tpu_custom_call.1} parent=1 // pred_check_branch
      %80 = sbr.rel (0) target = $region9
    $region8: #{tpu_custom_call.1} parent=1 // pred_region
      %82 = vsyncadd [#allocation3], 0
      %s83 = sshll.u32 %s3, 4
      %s84 = int_to_ptr.hbm [resolvable:$true] %s83
      %s85 = sshll.u32 [#allocation2], 4
      %s86 = int_to_ptr.vmem [resolvable:$true] %s85
      %91 = dma.hbm_to_vmem [thread:$0]  %s84, 256, %s86, [#allocation3], 128, 128, 8
    $region9: #{tpu_custom_call.1} parent=1 // pred_fallthru
      _
    // Predicated region
    $region10: #{tpu_custom_call.1} parent=1 // pred_check
      _
    $region11: #{tpu_custom_call.1} parent=1 // pred_check_branch
      %93 = sbr.rel (0) target = $region13
    $region12: #{tpu_custom_call.1} parent=1 // pred_region
      %95 = vsyncadd [#allocation6], 0
      %s97 = sshll.u32 %s5, 4
      %s98 = int_to_ptr.hbm [resolvable:$true] %s97
      %s99 = sshll.u32 [#allocation5], 4
      %s100 = int_to_ptr.vmem [resolvable:$true] %s99
      %102 = dma.hbm_to_vmem [thread:$0]  %s98, 64, %s100, [#allocation6]
    $region13: #{tpu_custom_call.1} parent=1 // pred_fallthru
      _
    // Predicated region
    $region14: #{tpu_custom_call.1} parent=1 // pred_check
      _
    $region15: #{tpu_custom_call.1} parent=1 // pred_check_branch
      %104 = sbr.rel (0) target = $region17
    $region16: #{tpu_custom_call.1} parent=1 // pred_region
      _
    $region17: #{tpu_custom_call.1} parent=1 // pred_fallthru
      _
    // Predicated region
    $region18: #{tpu_custom_call.1} parent=1 // pred_check
      _
    $region19: #{tpu_custom_call.1} parent=1 // pred_check_branch
      %106 = sbr.rel (0) target = $region21
    $region20: #{tpu_custom_call.1} parent=1 // pred_region
      _
    $region21: #{tpu_custom_call.1} parent=1 // pred_fallthru
      _
    // Predicated region
    $region22: #{tpu_custom_call.1} parent=1 // pred_check
      _
    $region23: #{tpu_custom_call.1} parent=1 // pred_check_branch
      %108 = sbr.rel (0) target = $region25
    $region24: #{tpu_custom_call.1} parent=1 // pred_region
      _
    $region25: #{tpu_custom_call.1} parent=1 // pred_fallthru
      _
    // Predicated region
    $region26: #{tpu_custom_call.1} parent=1 // pred_check
      _
    $region27: #{tpu_custom_call.1} parent=1 // pred_check_branch
      %110 = sbr.rel (0) target = $region29
    $region28: #{tpu_custom_call.1} parent=1 // pred_region
      _
    $region29: #{tpu_custom_call.1} parent=1 // pred_fallthru
      _
    // Predicated region
    $region30: #{tpu_custom_call.1} parent=1 // pred_check
      _
    $region31: #{tpu_custom_call.1} parent=1 // pred_check_branch
      %112 = sbr.rel (0) target = $region33
    $region32: #{tpu_custom_call.1} parent=1 // pred_region
      _
    $region33: #{tpu_custom_call.1} parent=1 // pred_fallthru
      _
    // Predicated region
    $region34: #{tpu_custom_call.1} parent=1 // pred_check
      _
    $region35: #{tpu_custom_call.1} parent=1 // pred_check_branch
      %114 = sbr.rel (0) target = $region37
    $region36: #{tpu_custom_call.1} parent=1 // pred_region
      _
    $region37: #{tpu_custom_call.1} parent=1 // pred_fallthru
      _
    // Predicated region
    $region38: #{tpu_custom_call.1} parent=1 // pred_check
      _
    $region39: #{tpu_custom_call.1} parent=1 // pred_check_branch
      %116 = sbr.rel (0) target = $region41
    $region40: #{tpu_custom_call.1} parent=1 // pred_region
      %118 = vsyncadd [#allocation6], 0
      %s120 = sshll.u32 %s19, 4
      %s121 = int_to_ptr.hbm [resolvable:$true] %s120
      %s122 = sshll.u32 [#allocation7], 4
      %s123 = int_to_ptr.vmem [resolvable:$true] %s122
      %125 = dma.hbm_to_vmem [thread:$0]  %s121, 16, %s123, [#allocation6]
    $region41: #{tpu_custom_call.1} parent=1 // pred_fallthru
      _
    // Predicated region
    $region42: #{tpu_custom_call.1} parent=1 // pred_check
      _
    $region43: #{tpu_custom_call.1} parent=1 // pred_check_branch
      %127 = sbr.rel (0) target = $region45
    $region44: #{tpu_custom_call.1} parent=1 // pred_region
      _
    $region45: #{tpu_custom_call.1} parent=1 // pred_fallthru
      _
    // Predicated region
    $region46: #{tpu_custom_call.1} parent=1 // pred_check
      _
    $region47: #{tpu_custom_call.1} parent=1 // pred_check_branch
      %129 = sbr.rel (0) target = $region49
    $region48: #{tpu_custom_call.1} parent=1 // pred_region
      %131 = vsyncadd [#allocation9], 0
      %s133 = sshll.u32 %s23, 4
      %s134 = int_to_ptr.hbm [resolvable:$true] %s133
      %s135 = sshll.u32 [#allocation8], 4
      %s136 = int_to_ptr.vmem [resolvable:$true] %s135
      %138 = dma.hbm_to_vmem [thread:$0]  %s134, 16, %s136, [#allocation9]
    $region49: #{tpu_custom_call.1} parent=1 // pred_fallthru
      _
    // Predicated region
    $region50: #{tpu_custom_call.1} parent=1 // pred_check
      _
    $region51: #{tpu_custom_call.1} parent=1 // pred_check_branch
      %140 = sbr.rel (0) target = $region53
    $region52: #{tpu_custom_call.1} parent=1 // pred_region
      _
    $region53: #{tpu_custom_call.1} parent=1 // pred_fallthru
      _
    // Predicated region
    $region54: #{tpu_custom_call.1} parent=1 // pred_check
      _
    $region55: #{tpu_custom_call.1} parent=1 // pred_check_branch
      %142 = sbr.rel (0) target = $region57
    $region56: #{tpu_custom_call.1} parent=1 // pred_region
      %144 = vsyncadd [#allocation9], 0
      %s146 = sshll.u32 %s27, 4
      %s147 = int_to_ptr.hbm [resolvable:$true] %s146
      %s148 = sshll.u32 [#allocation10], 4
      %s149 = int_to_ptr.vmem [resolvable:$true] %s148
      %151 = dma.hbm_to_vmem [thread:$0]  %s147, 16, %s149, [#allocation9]
    $region57: #{tpu_custom_call.1} parent=1 // pred_fallthru
      _
    // Predicated region
    $region58: #{tpu_custom_call.1} parent=1 // pred_check
      _
    $region59: #{tpu_custom_call.1} parent=1 // pred_check_branch
      %153 = sbr.rel (0) target = $region61
    $region60: #{tpu_custom_call.1} parent=1 // pred_region
      _
    $region61: #{tpu_custom_call.1} parent=1 // pred_fallthru
      _
    // Predicated region
    $region62: #{tpu_custom_call.1} parent=1 // pred_check
      _
    $region63: #{tpu_custom_call.1} parent=1 // pred_check_branch
      %155 = sbr.rel (0) target = $region65
    $region64: #{tpu_custom_call.1} parent=1 // pred_region
      _
    $region65: #{tpu_custom_call.1} parent=1 // pred_fallthru
      _
    // Predicated region
    $region66: #{tpu_custom_call.1} parent=1 // pred_check
      _
    $region67: #{tpu_custom_call.1} parent=1 // pred_check_branch
      %157 = sbr.rel (0) target = $region69
    $region68: #{tpu_custom_call.1} parent=1 // pred_region
      _
    $region69: #{tpu_custom_call.1} parent=1 // pred_fallthru
      _
    // Predicated region
    $region70: #{tpu_custom_call.1} parent=1 // pred_check
      _
    $region71: #{tpu_custom_call.1} parent=1 // pred_check_branch
      %159 = sbr.rel (0) target = $region73
    $region72: #{tpu_custom_call.1} parent=1 // pred_region
      %161 = vsyncadd [#allocation12], 0
      %s163 = sshll.u32 %s35, 4
      %s164 = int_to_ptr.hbm [resolvable:$true] %s163
      %s165 = sshll.u32 [#allocation11], 4
      %s166 = int_to_ptr.vmem [resolvable:$true] %s165
      %168 = dma.hbm_to_vmem [thread:$0]  %s164, 16, %s166, [#allocation12]
    $region73: #{tpu_custom_call.1} parent=1 // pred_fallthru
      _
    // Predicated region
    $region74: #{tpu_custom_call.1} parent=1 // pred_check
      _
    $region75: #{tpu_custom_call.1} parent=1 // pred_check_branch
      %170 = sbr.rel (0) target = $region77
    $region76: #{tpu_custom_call.1} parent=1 // pred_region
      _
    $region77: #{tpu_custom_call.1} parent=1 // pred_fallthru
      _
    // Predicated region
    $region78: #{tpu_custom_call.1} parent=1 // pred_check
      _
    $region79: #{tpu_custom_call.1} parent=1 // pred_check_branch
      %172 = sbr.rel (0) target = $region81
    $region80: #{tpu_custom_call.1} parent=1 // pred_region
      %174 = vsyncadd [#allocation12], 0
      %s176 = sshll.u32 %s39, 4
      %s177 = int_to_ptr.hbm [resolvable:$true] %s176
      %s178 = sshll.u32 [#allocation13], 4
      %s179 = int_to_ptr.vmem [resolvable:$true] %s178
      %181 = dma.hbm_to_vmem [thread:$0]  %s177, 16, %s179, [#allocation12]
    $region81: #{tpu_custom_call.1} parent=1 // pred_fallthru
      _
    // Predicated region
    $region82: #{tpu_custom_call.1} parent=1 // pred_check
      _
    $region83: #{tpu_custom_call.1} parent=1 // pred_check_branch
      %183 = sbr.rel (0) target = $region85
    $region84: #{tpu_custom_call.1} parent=1 // pred_region
      _
    $region85: #{tpu_custom_call.1} parent=1 // pred_fallthru
      _
    // Predicated region
    $region86: #{tpu_custom_call.1} parent=1 // pred_check
      _
    $region87: #{tpu_custom_call.1} parent=1 // pred_check_branch
      %185 = sbr.rel (0) target = $region89
    $region88: #{tpu_custom_call.1} parent=1 // pred_region
      _
    $region89: #{tpu_custom_call.1} parent=1 // pred_fallthru
      _
    // Predicated region
    $region90: #{tpu_custom_call.1} parent=1 // pred_check
      _
    $region91: #{tpu_custom_call.1} parent=1 // pred_check_branch
      %187 = sbr.rel (0) target = $region93
    $region92: #{tpu_custom_call.1} parent=1 // pred_region
      _
    $region93: #{tpu_custom_call.1} parent=1 // pred_fallthru
      _
    // Predicated region
    $region94: #{tpu_custom_call.1} parent=1 // pred_check
      _
    $region95: #{tpu_custom_call.1} parent=1 // pred_check_branch
      %189 = sbr.rel (0) target = $region97
    $region96: #{tpu_custom_call.1} parent=1 // pred_region
      _
    $region97: #{tpu_custom_call.1} parent=1 // pred_fallthru
      _
    // Predicated region
    $region98: #{tpu_custom_call.1} parent=1 // pred_check
      _
    $region99: #{tpu_custom_call.1} parent=1 // pred_check_branch
      %191 = sbr.rel (0) target = $region101
    $region100: #{tpu_custom_call.1} parent=1 // pred_region
      _
    $region101: #{tpu_custom_call.1} parent=1 // pred_fallthru
      _
    // Predicated region
    $region102: #{tpu_custom_call.1} parent=1 // pred_check
      _
    $region103: #{tpu_custom_call.1} parent=1 // pred_check_branch
      %193 = sbr.rel (0) target = $region105
    $region104: #{tpu_custom_call.1} parent=1 // pred_region
      _
    $region105: #{tpu_custom_call.1} parent=1 // pred_fallthru
      _
    // Predicated region
    $region106: #{tpu_custom_call.1} parent=1 // pred_check
      _
    $region107: #{tpu_custom_call.1} parent=1 // pred_check_branch
      %195 = sbr.rel (0) target = $region109
    $region108: #{tpu_custom_call.1} parent=1 // pred_region
      %197 = vsyncadd [#allocation15], 0
      %s198 = sshll.u32 %s53, 4
      %s199 = int_to_ptr.hbm [resolvable:$true] %s198
      %s200 = sshll.u32 [#allocation14], 4
      %s201 = int_to_ptr.vmem [resolvable:$true] %s200
      %206 = dma.hbm_to_vmem [thread:$0]  %s199, 512, %s201, [#allocation15], 128, 128, 8
    $region109: #{tpu_custom_call.1} parent=1 // pred_fallthru
      _
    // Predicated region
    $region110: #{tpu_custom_call.1} parent=1 // pred_check
      _
    $region111: #{tpu_custom_call.1} parent=1 // pred_check_branch
      %208 = sbr.rel (0) target = $region113
    $region112: #{tpu_custom_call.1} parent=1 // pred_region
      _
    $region113: #{tpu_custom_call.1} parent=1 // pred_fallthru
      _
    // Predicated region
    $region114: #{tpu_custom_call.1} parent=1 // pred_check
      _
    $region115: #{tpu_custom_call.1} parent=1 // pred_check_branch
      %210 = sbr.rel (0) target = $region117
    $region116: #{tpu_custom_call.1} parent=1 // pred_region
      %212 = vsyncadd [#allocation15], 0
      %s213 = sshll.u32 %s57, 4
      %s214 = int_to_ptr.hbm [resolvable:$true] %s213
      %s215 = sshll.u32 [#allocation16], 4
      %s216 = int_to_ptr.vmem [resolvable:$true] %s215
      %221 = dma.hbm_to_vmem [thread:$0]  %s214, 512, %s216, [#allocation15], 128, 128, 8
    $region117: #{tpu_custom_call.1} parent=1 // pred_fallthru
      _
    // Predicated region
    $region118: #{tpu_custom_call.1} parent=1 // pred_check
      _
    $region119: #{tpu_custom_call.1} parent=1 // pred_check_branch
      %223 = sbr.rel (0) target = $region121
    $region120: #{tpu_custom_call.1} parent=1 // pred_region
      %225 = vsyncadd [#allocation18], 0
      %s226 = sshll.u32 %s59, 4
      %s227 = int_to_ptr.hbm [resolvable:$true] %s226
      %s228 = sshll.u32 [#allocation17], 4
      %s229 = int_to_ptr.vmem [resolvable:$true] %s228
      %234 = dma.hbm_to_vmem [thread:$0]  %s227, 512, %s229, [#allocation18], 128, 128, 8
    $region121: #{tpu_custom_call.1} parent=1 // pred_fallthru
      _
    // Predicated region
    $region122: #{tpu_custom_call.1} parent=1 // pred_check
      _
    $region123: #{tpu_custom_call.1} parent=1 // pred_check_branch
      %236 = sbr.rel (0) target = $region125
    $region124: #{tpu_custom_call.1} parent=1 // pred_region
      %238 = dma.done [#allocation3], 256
    $region125: #{tpu_custom_call.1} parent=1 // pred_fallthru
      _
    // Predicated region
    $region126: #{tpu_custom_call.1} parent=1 // pred_check
      _
    $region127: #{tpu_custom_call.1} parent=1 // pred_check_branch
      %240 = sbr.rel (0) target = $region129
    $region128: #{tpu_custom_call.1} parent=1 // pred_region
      %242 = dma.done [#allocation6], 64
    $region129: #{tpu_custom_call.1} parent=1 // pred_fallthru
      _
    // Predicated region
    $region130: #{tpu_custom_call.1} parent=1 // pred_check
      _
    $region131: #{tpu_custom_call.1} parent=1 // pred_check_branch
      %244 = sbr.rel (0) target = $region133
    $region132: #{tpu_custom_call.1} parent=1 // pred_region
      %246 = dma.done [#allocation6], 16
    $region133: #{tpu_custom_call.1} parent=1 // pred_fallthru
      _
    // Predicated region
    $region134: #{tpu_custom_call.1} parent=1 // pred_check
      _
    $region135: #{tpu_custom_call.1} parent=1 // pred_check_branch
      %248 = sbr.rel (0) target = $region137
    $region136: #{tpu_custom_call.1} parent=1 // pred_region
      %250 = dma.done [#allocation9], 16
    $region137: #{tpu_custom_call.1} parent=1 // pred_fallthru
      _
    // Predicated region
    $region138: #{tpu_custom_call.1} parent=1 // pred_check
      _
    $region139: #{tpu_custom_call.1} parent=1 // pred_check_branch
      %252 = sbr.rel (0) target = $region141
    $region140: #{tpu_custom_call.1} parent=1 // pred_region
      %254 = dma.done [#allocation9], 16
    $region141: #{tpu_custom_call.1} parent=1 // pred_fallthru
      _
    // Predicated region
    $region142: #{tpu_custom_call.1} parent=1 // pred_check
      _
    $region143: #{tpu_custom_call.1} parent=1 // pred_check_branch
      %256 = sbr.rel (0) target = $region145
    $region144: #{tpu_custom_call.1} parent=1 // pred_region
      %258 = dma.done [#allocation12], 16
    $region145: #{tpu_custom_call.1} parent=1 // pred_fallthru
      _
    // Predicated region
    $region146: #{tpu_custom_call.1} parent=1 // pred_check
      _
    $region147: #{tpu_custom_call.1} parent=1 // pred_check_branch
      %260 = sbr.rel (0) target = $region149
    $region148: #{tpu_custom_call.1} parent=1 // pred_region
      %262 = dma.done [#allocation12], 16
    $region149: #{tpu_custom_call.1} parent=1 // pred_fallthru
      _
    // Predicated region
    $region150: #{tpu_custom_call.1} parent=1 // pred_check
      _
    $region151: #{tpu_custom_call.1} parent=1 // pred_check_branch
      %264 = sbr.rel (0) target = $region153
    $region152: #{tpu_custom_call.1} parent=1 // pred_region
      %266 = dma.done [#allocation15], 512
    $region153: #{tpu_custom_call.1} parent=1 // pred_fallthru
      _
    // Predicated region
    $region154: #{tpu_custom_call.1} parent=1 // pred_check
      _
    $region155: #{tpu_custom_call.1} parent=1 // pred_check_branch
      %268 = sbr.rel (0) target = $region157
    $region156: #{tpu_custom_call.1} parent=1 // pred_region
      %270 = dma.done [#allocation15], 512
    $region157: #{tpu_custom_call.1} parent=1 // pred_fallthru
      _
    // Predicated region
    $region158: #{tpu_custom_call.1} parent=1 // pred_check
      _
    $region159: #{tpu_custom_call.1} parent=1 // pred_check_branch
      %272 = sbr.rel (0) target = $region161
    $region160: #{tpu_custom_call.1} parent=1 // pred_region
      %274 = dma.done [#allocation18], 512
    $region161: #{tpu_custom_call.1} parent=1 // pred_fallthru
      _
    %v275 = vld [vmem:[#allocation2] sm:$0xff]
    %v276 = vld [vmem:[#allocation2 + $0x8] sm:$0xff]
    %vm277 = vcmp.lt.f32.partialorder %v275, 0.1
    %vm278 = vcmp.lt.f32.partialorder %v276, 0.1
    %v279 = vsel %vm277, -1e+10, 0.0
    %v280 = vsel %vm278, -1e+10, 0.0
    %v281 = vld [vmem:[%s1] sm:$0xff]
    %v282 = vld [vmem:[%s1 + $0x8] sm:$0xff]
    %v283 = vld [vmem:[#allocation5] sm:$0xf]
    %v284 = vld [vmem:[%s7] sm:$0x1]
    %v286 = vperm.slane %v284, 0
    %vm288 = vcmask 31744
    %v290 = vsel %vm288, %v281, 0
    %v293 = vsel %vm288, %v282, 0
    %vm295 = vcmask 1043456
    %v297 = vsel %vm295, %v283, 0
    %299 = vmatpush.msra.mxu0 0.0
    %300 = vmatpush.msra.mxu0 0.0
    %301 = vmatpush.msra.mxu0 0.0
    %302 = vmatpush.msra.mxu0 0.0
    %303 = vmatpush.msra.mxu0 0.0
    %304 = vmatpush.msra.mxu0 0.0
    %305 = vmatpush.msra.mxu0 0.0
    %306 = vmatpush.msra.mxu0 0.0
    %307 = vmatpush.msra.mxu0 0.0
    %308 = vmatpush.msra.mxu0 0.0
    %309 = vmatpush.msra.mxu0 0.0
    %310 = vmatpush.msra.mxu0 0.0
    %311 = vmatpush.msra.mxu0 0.0
    %312 = vmatpush.msra.mxu0 0.0
    %313 = vmatpush.msra.mxu0 0.0
    %314 = vmatpush.msra.mxu0 %v297
    %315 = vmatmul.f32.gmra.mxu0 %v290
    %v316 = vpop.f32.mrf.mxu0
    %v317 = vadd.f32 %v286, %v316
    %318 = vmatmul.f32.gmra.mxu0 %v293
    %v319 = vpop.f32.mrf.mxu0
    %v320 = vadd.f32 %v286, %v319
    %321 = vdwg.mxu0
    %v322 = vmax.f32 %v317, 0.0
    %v323 = vmax.f32 %v320, 0.0
    %v324 = vld [vmem:[%s9] sm:$0xff]
    %v325 = vld [vmem:[%s9 + $0x8] sm:$0xff]
    %v326 = vld [vmem:[%s9 + $0x10] sm:$0xff]
    %v327 = vld [vmem:[%s9 + $0x18] sm:$0xff]
    %v328 = vld [vmem:[%s9 + $0x20] sm:$0xff]
    %v329 = vld [vmem:[%s9 + $0x28] sm:$0xff]
    %v330 = vld [vmem:[%s9 + $0x30] sm:$0xff]
    %v331 = vld [vmem:[%s9 + $0x38] sm:$0xff]
    %v332 = vld [vmem:[%s9 + $0x40] sm:$0xff]
    %v333 = vld [vmem:[%s9 + $0x48] sm:$0xff]
    %v334 = vld [vmem:[%s9 + $0x50] sm:$0xff]
    %v335 = vld [vmem:[%s9 + $0x58] sm:$0xff]
    %v336 = vld [vmem:[%s9 + $0x60] sm:$0xff]
    %v337 = vld [vmem:[%s9 + $0x68] sm:$0xff]
    %v338 = vld [vmem:[%s9 + $0x70] sm:$0xff]
    %v339 = vld [vmem:[%s9 + $0x78] sm:$0xff]
    %v340 = vld [vmem:[%s11] sm:$0x1]
    %v342 = vperm.slane %v340, 0
    %344 = vmatpush.msra.mxu0 %v339
    %345 = vmatpush.msra.mxu0 %v338
    %346 = vmatpush.msra.mxu0 %v337
    %347 = vmatpush.msra.mxu0 %v336
    %348 = vmatpush.msra.mxu0 %v335
    %349 = vmatpush.msra.mxu0 %v334
    %350 = vmatpush.msra.mxu0 %v333
    %351 = vmatpush.msra.mxu0 %v332
    %352 = vmatpush.msra.mxu0 %v331
    %353 = vmatpush.msra.mxu0 %v330
    %354 = vmatpush.msra.mxu0 %v329
    %355 = vmatpush.msra.mxu0 %v328
    %356 = vmatpush.msra.mxu0 %v327
    %357 = vmatpush.msra.mxu0 %v326
    %358 = vmatpush.msra.mxu0 %v325
    %359 = vmatpush.msra.mxu0 %v324
    %360 = vmatmul.f32.gmra.mxu0 %v322
    %v361 = vpop.f32.mrf.mxu0
    %v362 = vadd.f32 %v342, %v361
    %363 = vmatmul.f32.gmra.mxu0 %v323
    %v364 = vpop.f32.mrf.mxu0
    %v365 = vadd.f32 %v342, %v364
    %366 = vdwg.mxu0
    %v367 = vmax.f32 %v362, 0.0
    %v368 = vmax.f32 %v365, 0.0
    %v369 = vld [vmem:[%s13] sm:$0xff]
    %v370 = vld [vmem:[%s13 + $0x8] sm:$0xff]
    %v371 = vld [vmem:[%s13 + $0x10] sm:$0xff]
    %v372 = vld [vmem:[%s13 + $0x18] sm:$0xff]
    %v373 = vld [vmem:[%s15] sm:$0x1]
    %v375 = vperm.slane %v373, 0
    %vm377 = vcmask 261120
    %v379 = vsel %vm377, %v367, 0
    %v382 = vsel %vm377, %v368, 0
    %384 = vmatpush.msra.mxu0 0.0
    %385 = vmatpush.msra.mxu0 0.0
    %386 = vmatpush.msra.mxu0 0.0
    %387 = vmatpush.msra.mxu0 0.0
    %388 = vmatpush.msra.mxu0 0.0
    %389 = vmatpush.msra.mxu0 0.0
    %390 = vmatpush.msra.mxu0 0.0
    %391 = vmatpush.msra.mxu0 0.0
    %392 = vmatpush.msra.mxu0 0.0
    %393 = vmatpush.msra.mxu0 0.0
    %394 = vmatpush.msra.mxu0 0.0
    %395 = vmatpush.msra.mxu0 0.0
    %396 = vmatpush.msra.mxu0 %v372
    %397 = vmatpush.msra.mxu0 %v371
    %398 = vmatpush.msra.mxu0 %v370
    %399 = vmatpush.msra.mxu0 %v369
    %400 = vmatmul.f32.gmra.mxu0 %v379
    %v401 = vpop.f32.mrf.mxu0
    %v402 = vadd.f32 %v375, %v401
    %403 = vmatmul.f32.gmra.mxu0 %v382
    %v404 = vpop.f32.mrf.mxu0
    %v405 = vadd.f32 %v375, %v404
    %406 = vdwg.mxu0
    %v407 = vld [vmem:[%s17] sm:$0xff]
    %v408 = vld [vmem:[%s17 + $0x8] sm:$0xff]
    %v409 = vld [vmem:[%s17 + $0x10] sm:$0xff]
    %v410 = vld [vmem:[%s17 + $0x18] sm:$0xff]
    %v411 = vld [vmem:[#allocation7] sm:$0x1]
    %v413 = vperm.slane %v411, 0
    %415 = vmatpush.msra.mxu0 0.0
    %416 = vmatpush.msra.mxu0 0.0
    %417 = vmatpush.msra.mxu0 0.0
    %418 = vmatpush.msra.mxu0 0.0
    %419 = vmatpush.msra.mxu0 0.0
    %420 = vmatpush.msra.mxu0 0.0
    %421 = vmatpush.msra.mxu0 0.0
    %422 = vmatpush.msra.mxu0 0.0
    %423 = vmatpush.msra.mxu0 0.0
    %424 = vmatpush.msra.mxu0 0.0
    %425 = vmatpush.msra.mxu0 0.0
    %426 = vmatpush.msra.mxu0 0.0
    %427 = vmatpush.msra.mxu0 %v410
    %428 = vmatpush.msra.mxu0 %v409
    %429 = vmatpush.msra.mxu0 %v408
    %430 = vmatpush.msra.mxu0 %v407
    %431 = vmatmul.f32.gmra.mxu0 %v379
    %v432 = vpop.f32.mrf.mxu0
    %v433 = vadd.f32 %v413, %v432
    %434 = vmatmul.f32.gmra.mxu0 %v382
    %v435 = vpop.f32.mrf.mxu0
    %v436 = vadd.f32 %v413, %v435
    %437 = vdwg.mxu0
    %v438 = vld [vmem:[%s21] sm:$0xff]
    %v439 = vld [vmem:[%s21 + $0x8] sm:$0xff]
    %v440 = vld [vmem:[%s21 + $0x10] sm:$0xff]
    %v441 = vld [vmem:[%s21 + $0x18] sm:$0xff]
    %v442 = vld [vmem:[#allocation8] sm:$0x1]
    %v444 = vperm.slane %v442, 0
    %446 = vmatpush.msra.mxu0 0.0
    %447 = vmatpush.msra.mxu0 0.0
    %448 = vmatpush.msra.mxu0 0.0
    %449 = vmatpush.msra.mxu0 0.0
    %450 = vmatpush.msra.mxu0 0.0
    %451 = vmatpush.msra.mxu0 0.0
    %452 = vmatpush.msra.mxu0 0.0
    %453 = vmatpush.msra.mxu0 0.0
    %454 = vmatpush.msra.mxu0 0.0
    %455 = vmatpush.msra.mxu0 0.0
    %456 = vmatpush.msra.mxu0 0.0
    %457 = vmatpush.msra.mxu0 0.0
    %458 = vmatpush.msra.mxu0 %v441
    %459 = vmatpush.msra.mxu0 %v440
    %460 = vmatpush.msra.mxu0 %v439
    %461 = vmatpush.msra.mxu0 %v438
    %462 = vmatmul.f32.gmra.mxu0 %v379
    %v463 = vpop.f32.mrf.mxu0
    %v464 = vadd.f32 %v444, %v463
    %465 = vmatmul.f32.gmra.mxu0 %v382
    %v466 = vpop.f32.mrf.mxu0
    %v467 = vadd.f32 %v444, %v466
    %468 = vdwg.mxu0
    %v469 = vld [vmem:[%s29] sm:$0xff]
    %v470 = vld [vmem:[%s29 + $0x8] sm:$0xff]
    %v471 = vld [vmem:[%s29 + $0x10] sm:$0xff]
    %v472 = vld [vmem:[%s29 + $0x18] sm:$0xff]
    %v473 = vmul.f32 %v402, %v469
    %v474 = vmul.f32 %v402, %v470
    %v475 = vmul.f32 %v402, %v471
    %v476 = vmul.f32 %v402, %v472
    %v477 = vmul.f32 %v405, %v469
    %v478 = vmul.f32 %v405, %v470
    %v479 = vmul.f32 %v405, %v471
    %v480 = vmul.f32 %v405, %v472
    %v482 = vsel %vm377, %v473, 0
    %v485 = vsel %vm377, %v474, 0
    %v488 = vsel %vm377, %v475, 0
    %v491 = vsel %vm377, %v476, 0
    %v494 = vsel %vm377, %v433, 0
    %496 = vmatpush.xpose.msra.mxu0 0.0
    %497 = vmatpush.xpose.msra.mxu0 0.0
    %498 = vmatpush.xpose.msra.mxu0 0.0
    %499 = vmatpush.xpose.msra.mxu0 0.0
    %500 = vmatpush.xpose.msra.mxu0 0.0
    %501 = vmatpush.xpose.msra.mxu0 0.0
    %502 = vmatpush.xpose.msra.mxu0 0.0
    %503 = vmatpush.xpose.msra.mxu0 0.0
    %504 = vmatpush.xpose.msra.mxu0 0.0
    %505 = vmatpush.xpose.msra.mxu0 0.0
    %506 = vmatpush.xpose.msra.mxu0 0.0
    %507 = vmatpush.xpose.msra.mxu0 0.0
    %508 = vmatpush.xpose.msra.mxu0 0.0
    %509 = vmatpush.xpose.msra.mxu0 0.0
    %510 = vmatpush.xpose.msra.mxu0 0.0
    %511 = vmatpush.xpose.msra.mxu0 %v494
    %512 = vmatmul.f32.gmra.mxu0 %v482
    %v513 = vpop.f32.mrf.mxu0
    %v514 = vadd.f32 %v279, %v513
    %515 = vmatmul.f32.gmra.mxu0 %v485
    %v516 = vpop.f32.mrf.mxu0
    %v517 = vadd.f32 %v279, %v516
    %518 = vmatmul.f32.gmra.mxu0 %v488
    %v519 = vpop.f32.mrf.mxu0
    %v520 = vadd.f32 %v279, %v519
    %521 = vmatmul.f32.gmra.mxu0 %v491
    %v522 = vpop.f32.mrf.mxu0
    %v523 = vadd.f32 %v279, %v522
    %524 = vdwg.mxu0
    %v526 = vsel %vm377, %v477, 0
    %v529 = vsel %vm377, %v478, 0
    %v532 = vsel %vm377, %v479, 0
    %v535 = vsel %vm377, %v480, 0
    %v538 = vsel %vm377, %v436, 0
    %540 = vmatpush.xpose.msra.mxu0 0.0
    %541 = vmatpush.xpose.msra.mxu0 0.0
    %542 = vmatpush.xpose.msra.mxu0 0.0
    %543 = vmatpush.xpose.msra.mxu0 0.0
    %544 = vmatpush.xpose.msra.mxu0 0.0
    %545 = vmatpush.xpose.msra.mxu0 0.0
    %546 = vmatpush.xpose.msra.mxu0 0.0
    %547 = vmatpush.xpose.msra.mxu0 0.0
    %548 = vmatpush.xpose.msra.mxu0 0.0
    %549 = vmatpush.xpose.msra.mxu0 0.0
    %550 = vmatpush.xpose.msra.mxu0 0.0
    %551 = vmatpush.xpose.msra.mxu0 0.0
    %552 = vmatpush.xpose.msra.mxu0 0.0
    %553 = vmatpush.xpose.msra.mxu0 0.0
    %554 = vmatpush.xpose.msra.mxu0 0.0
    %555 = vmatpush.xpose.msra.mxu0 %v538
    %556 = vmatmul.f32.gmra.mxu0 %v526
    %v557 = vpop.f32.mrf.mxu0
    %v558 = vadd.f32 %v280, %v557
    %559 = vmatmul.f32.gmra.mxu0 %v529
    %v560 = vpop.f32.mrf.mxu0
    %v561 = vadd.f32 %v280, %v560
    %562 = vmatmul.f32.gmra.mxu0 %v532
    %v563 = vpop.f32.mrf.mxu0
    %v564 = vadd.f32 %v280, %v563
    %565 = vmatmul.f32.gmra.mxu0 %v535
    %v566 = vpop.f32.mrf.mxu0
    %v567 = vadd.f32 %v280, %v566
    %568 = vdwg.mxu0
    %vm569 = vcmask 64512
    %v570 = vsel %vm569, %v514, -inf
    %571 = vmax.xlane.f32.xlu0 %v570
    %v572 = vpop.xlane.xlu0 %571
    %v573 = vsel %vm569, %v517, -inf
    %574 = vmax.xlane.f32.xlu0 %v573
    %v575 = vpop.xlane.xlu0 %574
    %v576 = vsel %vm569, %v520, -inf
    %577 = vmax.xlane.f32.xlu0 %v576
    %v578 = vpop.xlane.xlu0 %577
    %v579 = vsel %vm569, %v523, -inf
    %580 = vmax.xlane.f32.xlu0 %v579
    %v581 = vpop.xlane.xlu0 %580
    %v582 = vsel %vm569, %v558, -inf
    %583 = vmax.xlane.f32.xlu0 %v582
    %v584 = vpop.xlane.xlu0 %583
    %v585 = vsel %vm569, %v561, -inf
    %586 = vmax.xlane.f32.xlu0 %v585
    %v587 = vpop.xlane.xlu0 %586
    %v588 = vsel %vm569, %v564, -inf
    %589 = vmax.xlane.f32.xlu0 %v588
    %v590 = vpop.xlane.xlu0 %589
    %v591 = vsel %vm569, %v567, -inf
    %592 = vmax.xlane.f32.xlu0 %v591
    %v593 = vpop.xlane.xlu0 %592
    %v594 = vsub.f32 %v514, %v572
    %v595 = vsub.f32 %v517, %v575
    %v596 = vsub.f32 %v520, %v578
    %v597 = vsub.f32 %v523, %v581
    %v598 = vsub.f32 %v558, %v584
    %v599 = vsub.f32 %v561, %v587
    %v600 = vsub.f32 %v564, %v590
    %v601 = vsub.f32 %v567, %v593
    %v602 = vmul.f32 %v594, 1.442695
    %v603 = vpow.pop %v602
    %v604 = vmul.f32 %v595, 1.442695
    %v605 = vpow.pop %v604
    %v606 = vmul.f32 %v596, 1.442695
    %v607 = vpow.pop %v606
    %v608 = vmul.f32 %v597, 1.442695
    %v609 = vpow.pop %v608
    %v610 = vmul.f32 %v598, 1.442695
    %v611 = vpow.pop %v610
    %v612 = vmul.f32 %v599, 1.442695
    %v613 = vpow.pop %v612
    %v614 = vmul.f32 %v600, 1.442695
    %v615 = vpow.pop %v614
    %v616 = vmul.f32 %v601, 1.442695
    %v617 = vpow.pop %v616
    %v618 = vsel %vm569, %v603, 0.0
    %619 = vadd.xlane.f32.xlu0 %v618
    %v620 = vpop.xlane.xlu0 %619
    %v621 = vsel %vm569, %v605, 0.0
    %622 = vadd.xlane.f32.xlu0 %v621
    %v623 = vpop.xlane.xlu0 %622
    %v624 = vsel %vm569, %v607, 0.0
    %625 = vadd.xlane.f32.xlu0 %v624
    %v626 = vpop.xlane.xlu0 %625
    %v627 = vsel %vm569, %v609, 0.0
    %628 = vadd.xlane.f32.xlu0 %v627
    %v629 = vpop.xlane.xlu0 %628
    %v630 = vsel %vm569, %v611, 0.0
    %631 = vadd.xlane.f32.xlu0 %v630
    %v632 = vpop.xlane.xlu0 %631
    %v633 = vsel %vm569, %v613, 0.0
    %634 = vadd.xlane.f32.xlu0 %v633
    %v635 = vpop.xlane.xlu0 %634
    %v636 = vsel %vm569, %v615, 0.0
    %637 = vadd.xlane.f32.xlu0 %v636
    %v638 = vpop.xlane.xlu0 %637
    %v639 = vsel %vm569, %v617, 0.0
    %640 = vadd.xlane.f32.xlu0 %v639
    %v641 = vpop.xlane.xlu0 %640
    %v642 = vrcp.pop %v620
    %v643 = vrcp.pop %v623
    %v644 = vrcp.pop %v626
    %v645 = vrcp.pop %v629
    %v646 = vrcp.pop %v632
    %v647 = vrcp.pop %v635
    %v648 = vrcp.pop %v638
    %v649 = vrcp.pop %v641
    %v650 = vmul.f32 %v620, %v642
    %v651 = vmul.f32 %v623, %v643
    %v652 = vmul.f32 %v626, %v644
    %v653 = vmul.f32 %v629, %v645
    %v654 = vmul.f32 %v632, %v646
    %v655 = vmul.f32 %v635, %v647
    %v656 = vmul.f32 %v638, %v648
    %v657 = vmul.f32 %v641, %v649
    %v658 = vsub.f32 2.0, %v650
    %v659 = vsub.f32 2.0, %v651
    %v660 = vsub.f32 2.0, %v652
    %v661 = vsub.f32 2.0, %v653
    %v662 = vsub.f32 2.0, %v654
    %v663 = vsub.f32 2.0, %v655
    %v664 = vsub.f32 2.0, %v656
    %v665 = vsub.f32 2.0, %v657
    %v666 = vmul.f32 %v642, %v658
    %v667 = vmul.f32 %v643, %v659
    %v668 = vmul.f32 %v644, %v660
    %v669 = vmul.f32 %v645, %v661
    %v670 = vmul.f32 %v646, %v662
    %v671 = vmul.f32 %v647, %v663
    %v672 = vmul.f32 %v648, %v664
    %v673 = vmul.f32 %v649, %v665
    %v674 = vmul.f32 %v603, %v666
    %v675 = vmul.f32 %v605, %v667
    %v676 = vmul.f32 %v607, %v668
    %v677 = vmul.f32 %v609, %v669
    %v678 = vmul.f32 %v611, %v670
    %v679 = vmul.f32 %v613, %v671
    %v680 = vmul.f32 %v615, %v672
    %v681 = vmul.f32 %v617, %v673
    %v683 = vsel %vm569, %v674, 0
    %v686 = vsel %vm569, %v675, 0
    %v689 = vsel %vm569, %v676, 0
    %v692 = vsel %vm569, %v677, 0
    %694 = vmatpush.msra.mxu0 0.0
    %695 = vmatpush.msra.mxu0 0.0
    %696 = vmatpush.msra.mxu0 0.0
    %697 = vmatpush.msra.mxu0 0.0
    %698 = vmatpush.msra.mxu0 0.0
    %699 = vmatpush.msra.mxu0 0.0
    %700 = vmatpush.msra.mxu0 0.0
    %701 = vmatpush.msra.mxu0 0.0
    %702 = vmatpush.msra.mxu0 0.0
    %703 = vmatpush.msra.mxu0 0.0
    %704 = vmatpush.msra.mxu0 0.0
    %705 = vmatpush.msra.mxu0 0.0
    %706 = vmatpush.msra.mxu0 0.0
    %707 = vmatpush.msra.mxu0 0.0
    %708 = vmatpush.msra.mxu0 0.0
    %709 = vmatpush.msra.mxu0 %v464
    %710 = vmatmul.f32.gmra.mxu0 %v683
    %v711 = vpop.f32.mrf.mxu0
    %v712 = vadd.f32 0.0, %v711
    %713 = vmatmul.f32.gmra.mxu0 %v686
    %v714 = vpop.f32.mrf.mxu0
    %v715 = vadd.f32 0.0, %v714
    %716 = vmatmul.f32.gmra.mxu0 %v689
    %v717 = vpop.f32.mrf.mxu0
    %v718 = vadd.f32 0.0, %v717
    %719 = vmatmul.f32.gmra.mxu0 %v692
    %v720 = vpop.f32.mrf.mxu0
    %v721 = vadd.f32 0.0, %v720
    %722 = vdwg.mxu0
    %v724 = vsel %vm569, %v678, 0
    %v727 = vsel %vm569, %v679, 0
    %v730 = vsel %vm569, %v680, 0
    %v733 = vsel %vm569, %v681, 0
    %735 = vmatpush.msra.mxu0 0.0
    %736 = vmatpush.msra.mxu0 0.0
    %737 = vmatpush.msra.mxu0 0.0
    %738 = vmatpush.msra.mxu0 0.0
    %739 = vmatpush.msra.mxu0 0.0
    %740 = vmatpush.msra.mxu0 0.0
    %741 = vmatpush.msra.mxu0 0.0
    %742 = vmatpush.msra.mxu0 0.0
    %743 = vmatpush.msra.mxu0 0.0
    %744 = vmatpush.msra.mxu0 0.0
    %745 = vmatpush.msra.mxu0 0.0
    %746 = vmatpush.msra.mxu0 0.0
    %747 = vmatpush.msra.mxu0 0.0
    %748 = vmatpush.msra.mxu0 0.0
    %749 = vmatpush.msra.mxu0 0.0
    %750 = vmatpush.msra.mxu0 %v467
    %751 = vmatmul.f32.gmra.mxu0 %v724
    %v752 = vpop.f32.mrf.mxu0
    %v753 = vadd.f32 0.0, %v752
    %754 = vmatmul.f32.gmra.mxu0 %v727
    %v755 = vpop.f32.mrf.mxu0
    %v756 = vadd.f32 0.0, %v755
    %757 = vmatmul.f32.gmra.mxu0 %v730
    %v758 = vpop.f32.mrf.mxu0
    %v759 = vadd.f32 0.0, %v758
    %760 = vmatmul.f32.gmra.mxu0 %v733
    %v761 = vpop.f32.mrf.mxu0
    %v762 = vadd.f32 0.0, %v761
    %763 = vdwg.mxu0
    %v764 = vld [vmem:[%s31] sm:$0xff]
    %v765 = vld [vmem:[%s31 + $0x8] sm:$0xff]
    %v766 = vld [vmem:[%s31 + $0x10] sm:$0xff]
    %v767 = vld [vmem:[%s31 + $0x18] sm:$0xff]
    %v768 = vmul.f32 %v712, %v764
    %v769 = vmul.f32 %v715, %v765
    %v770 = vmul.f32 %v718, %v766
    %v771 = vmul.f32 %v721, %v767
    %v772 = vmul.f32 %v753, %v764
    %v773 = vmul.f32 %v756, %v765
    %v774 = vmul.f32 %v759, %v766
    %v775 = vmul.f32 %v762, %v767
    %v776 = vadd.f32 %v768, %v769
    %v777 = vadd.f32 %v772, %v773
    %v778 = vadd.f32 %v776, %v770
    %v779 = vadd.f32 %v777, %v774
    %v780 = vadd.f32 %v778, %v771
    %v781 = vadd.f32 %v779, %v775
    %v782 = vld [vmem:[%s25] sm:$0xff]
    %v783 = vld [vmem:[%s25 + $0x8] sm:$0xff]
    %v784 = vld [vmem:[%s25 + $0x10] sm:$0xff]
    %v785 = vld [vmem:[%s25 + $0x18] sm:$0xff]
    %v786 = vld [vmem:[#allocation10] sm:$0x1]
    %v788 = vperm.slane %v786, 0
    %v791 = vsel %vm377, %v780, 0
    %v794 = vsel %vm377, %v781, 0
    %796 = vmatpush.msra.mxu0 0.0
    %797 = vmatpush.msra.mxu0 0.0
    %798 = vmatpush.msra.mxu0 0.0
    %799 = vmatpush.msra.mxu0 0.0
    %800 = vmatpush.msra.mxu0 0.0
    %801 = vmatpush.msra.mxu0 0.0
    %802 = vmatpush.msra.mxu0 0.0
    %803 = vmatpush.msra.mxu0 0.0
    %804 = vmatpush.msra.mxu0 0.0
    %805 = vmatpush.msra.mxu0 0.0
    %806 = vmatpush.msra.mxu0 0.0
    %807 = vmatpush.msra.mxu0 0.0
    %808 = vmatpush.msra.mxu0 %v785
    %809 = vmatpush.msra.mxu0 %v784
    %810 = vmatpush.msra.mxu0 %v783
    %811 = vmatpush.msra.mxu0 %v782
    %812 = vmatmul.f32.gmra.mxu0 %v791
    %v813 = vpop.f32.mrf.mxu0
    %v814 = vadd.f32 %v788, %v813
    %815 = vmatmul.f32.gmra.mxu0 %v794
    %v816 = vpop.f32.mrf.mxu0
    %v817 = vadd.f32 %v788, %v816
    %818 = vdwg.mxu0
    %v819 = vld [vmem:[%s33] sm:$0xff]
    %v820 = vld [vmem:[%s33 + $0x8] sm:$0xff]
    %v821 = vld [vmem:[%s33 + $0x10] sm:$0xff]
    %v822 = vld [vmem:[%s33 + $0x18] sm:$0xff]
    %v823 = vld [vmem:[#allocation11] sm:$0x1]
    %v825 = vperm.slane %v823, 0
    %v828 = vsel %vm377, %v814, 0
    %v831 = vsel %vm377, %v817, 0
    %833 = vmatpush.msra.mxu0 0.0
    %834 = vmatpush.msra.mxu0 0.0
    %835 = vmatpush.msra.mxu0 0.0
    %836 = vmatpush.msra.mxu0 0.0
    %837 = vmatpush.msra.mxu0 0.0
    %838 = vmatpush.msra.mxu0 0.0
    %839 = vmatpush.msra.mxu0 0.0
    %840 = vmatpush.msra.mxu0 0.0
    %841 = vmatpush.msra.mxu0 0.0
    %842 = vmatpush.msra.mxu0 0.0
    %843 = vmatpush.msra.mxu0 0.0
    %844 = vmatpush.msra.mxu0 0.0
    %845 = vmatpush.msra.mxu0 %v822
    %846 = vmatpush.msra.mxu0 %v821
    %847 = vmatpush.msra.mxu0 %v820
    %848 = vmatpush.msra.mxu0 %v819
    %849 = vmatmul.f32.gmra.mxu0 %v828
    %v850 = vpop.f32.mrf.mxu0
    %v851 = vadd.f32 %v825, %v850
    %852 = vmatmul.f32.gmra.mxu0 %v831
    %v853 = vpop.f32.mrf.mxu0
    %v854 = vadd.f32 %v825, %v853
    %855 = vdwg.mxu0
    %v856 = vmax.f32 %v851, 0.0
    %v857 = vmax.f32 %v854, 0.0
    %v858 = vld [vmem:[%s37] sm:$0xff]
    %v859 = vld [vmem:[%s37 + $0x8] sm:$0xff]
    %v860 = vld [vmem:[%s37 + $0x10] sm:$0xff]
    %v861 = vld [vmem:[%s37 + $0x18] sm:$0xff]
    %v862 = vld [vmem:[%s37 + $0x20] sm:$0xff]
    %v863 = vld [vmem:[%s37 + $0x28] sm:$0xff]
    %v864 = vld [vmem:[%s37 + $0x30] sm:$0xff]
    %v865 = vld [vmem:[%s37 + $0x38] sm:$0xff]
    %v866 = vld [vmem:[%s37 + $0x40] sm:$0xff]
    %v867 = vld [vmem:[%s37 + $0x48] sm:$0xff]
    %v868 = vld [vmem:[%s37 + $0x50] sm:$0xff]
    %v869 = vld [vmem:[%s37 + $0x58] sm:$0xff]
    %v870 = vld [vmem:[%s37 + $0x60] sm:$0xff]
    %v871 = vld [vmem:[%s37 + $0x68] sm:$0xff]
    %v872 = vld [vmem:[%s37 + $0x70] sm:$0xff]
    %v873 = vld [vmem:[%s37 + $0x78] sm:$0xff]
    %v874 = vld [vmem:[#allocation13] sm:$0x1]
    %v876 = vperm.slane %v874, 0
    %878 = vmatpush.msra.mxu0 %v873
    %879 = vmatpush.msra.mxu0 %v872
    %880 = vmatpush.msra.mxu0 %v871
    %881 = vmatpush.msra.mxu0 %v870
    %882 = vmatpush.msra.mxu0 %v869
    %883 = vmatpush.msra.mxu0 %v868
    %884 = vmatpush.msra.mxu0 %v867
    %885 = vmatpush.msra.mxu0 %v866
    %886 = vmatpush.msra.mxu0 %v865
    %887 = vmatpush.msra.mxu0 %v864
    %888 = vmatpush.msra.mxu0 %v863
    %889 = vmatpush.msra.mxu0 %v862
    %890 = vmatpush.msra.mxu0 %v861
    %891 = vmatpush.msra.mxu0 %v860
    %892 = vmatpush.msra.mxu0 %v859
    %893 = vmatpush.msra.mxu0 %v858
    %894 = vmatmul.f32.gmra.mxu0 %v856
    %v895 = vpop.f32.mrf.mxu0
    %v896 = vadd.f32 %v876, %v895
    %897 = vmatmul.f32.gmra.mxu0 %v857
    %v898 = vpop.f32.mrf.mxu0
    %v899 = vadd.f32 %v876, %v898
    %900 = vdwg.mxu0
    %v901 = vmax.f32 %v896, 0.0
    %v902 = vmax.f32 %v899, 0.0
    %v903 = vld [vmem:[%s41] sm:$0xff]
    %v904 = vld [vmem:[%s41 + $0x8] sm:$0xff]
    %v905 = vld [vmem:[%s41 + $0x10] sm:$0xff]
    %v906 = vld [vmem:[%s41 + $0x18] sm:$0xff]
    %v907 = vld [vmem:[%s43] sm:$0x1]
    %v909 = vperm.slane %v907, 0
    %v912 = vsel %vm377, %v901, 0
    %v915 = vsel %vm377, %v902, 0
    %917 = vmatpush.msra.mxu0 0.0
    %918 = vmatpush.msra.mxu0 0.0
    %919 = vmatpush.msra.mxu0 0.0
    %920 = vmatpush.msra.mxu0 0.0
    %921 = vmatpush.msra.mxu0 0.0
    %922 = vmatpush.msra.mxu0 0.0
    %923 = vmatpush.msra.mxu0 0.0
    %924 = vmatpush.msra.mxu0 0.0
    %925 = vmatpush.msra.mxu0 0.0
    %926 = vmatpush.msra.mxu0 0.0
    %927 = vmatpush.msra.mxu0 0.0
    %928 = vmatpush.msra.mxu0 0.0
    %929 = vmatpush.msra.mxu0 %v906
    %930 = vmatpush.msra.mxu0 %v905
    %931 = vmatpush.msra.mxu0 %v904
    %932 = vmatpush.msra.mxu0 %v903
    %933 = vmatmul.f32.gmra.mxu0 %v912
    %v934 = vpop.f32.mrf.mxu0
    %v935 = vadd.f32 %v909, %v934
    %936 = vmatmul.f32.gmra.mxu0 %v915
    %v937 = vpop.f32.mrf.mxu0
    %v938 = vadd.f32 %v909, %v937
    %939 = vdwg.mxu0
    %v940 = vld [vmem:[%s45] sm:$0xff]
    %v941 = vld [vmem:[%s45 + $0x8] sm:$0xff]
    %v942 = vld [vmem:[%s45 + $0x10] sm:$0xff]
    %v943 = vld [vmem:[%s45 + $0x18] sm:$0xff]
    %v944 = vld [vmem:[%s47] sm:$0x1]
    %v946 = vperm.slane %v944, 0
    %948 = vmatpush.msra.mxu0 0.0
    %949 = vmatpush.msra.mxu0 0.0
    %950 = vmatpush.msra.mxu0 0.0
    %951 = vmatpush.msra.mxu0 0.0
    %952 = vmatpush.msra.mxu0 0.0
    %953 = vmatpush.msra.mxu0 0.0
    %954 = vmatpush.msra.mxu0 0.0
    %955 = vmatpush.msra.mxu0 0.0
    %956 = vmatpush.msra.mxu0 0.0
    %957 = vmatpush.msra.mxu0 0.0
    %958 = vmatpush.msra.mxu0 0.0
    %959 = vmatpush.msra.mxu0 0.0
    %960 = vmatpush.msra.mxu0 %v943
    %961 = vmatpush.msra.mxu0 %v942
    %962 = vmatpush.msra.mxu0 %v941
    %963 = vmatpush.msra.mxu0 %v940
    %964 = vmatmul.f32.gmra.mxu0 %v912
    %v965 = vpop.f32.mrf.mxu0
    %v966 = vadd.f32 %v946, %v965
    %967 = vmatmul.f32.gmra.mxu0 %v915
    %v968 = vpop.f32.mrf.mxu0
    %v969 = vadd.f32 %v946, %v968
    %970 = vdwg.mxu0
    %v971 = vld [vmem:[%s49] sm:$0xff]
    %v972 = vld [vmem:[%s49 + $0x8] sm:$0xff]
    %v973 = vld [vmem:[%s49 + $0x10] sm:$0xff]
    %v974 = vld [vmem:[%s49 + $0x18] sm:$0xff]
    %v975 = vld [vmem:[%s51] sm:$0x1]
    %v977 = vperm.slane %v975, 0
    %979 = vmatpush.msra.mxu0 0.0
    %980 = vmatpush.msra.mxu0 0.0
    %981 = vmatpush.msra.mxu0 0.0
    %982 = vmatpush.msra.mxu0 0.0
    %983 = vmatpush.msra.mxu0 0.0
    %984 = vmatpush.msra.mxu0 0.0
    %985 = vmatpush.msra.mxu0 0.0
    %986 = vmatpush.msra.mxu0 0.0
    %987 = vmatpush.msra.mxu0 0.0
    %988 = vmatpush.msra.mxu0 0.0
    %989 = vmatpush.msra.mxu0 0.0
    %990 = vmatpush.msra.mxu0 0.0
    %991 = vmatpush.msra.mxu0 %v974
    %992 = vmatpush.msra.mxu0 %v973
    %993 = vmatpush.msra.mxu0 %v972
    %994 = vmatpush.msra.mxu0 %v971
    %995 = vmatmul.f32.gmra.mxu0 %v912
    %v996 = vpop.f32.mrf.mxu0
    %v997 = vadd.f32 %v977, %v996
    %998 = vmatmul.f32.gmra.mxu0 %v915
    %v999 = vpop.f32.mrf.mxu0
    %v1000 = vadd.f32 %v977, %v999
    %1001 = vdwg.mxu0
    %v1002 = vld [vmem:[#allocation16] sm:$0xff]
    %v1003 = vld [vmem:[#allocation16 + $0x8] sm:$0xff]
    %v1004 = vld [vmem:[#allocation16 + $0x10] sm:$0xff]
    %v1005 = vld [vmem:[#allocation16 + $0x18] sm:$0xff]
    %v1006 = vmul.f32 %v935, %v1002
    %v1007 = vmul.f32 %v935, %v1003
    %v1008 = vmul.f32 %v935, %v1004
    %v1009 = vmul.f32 %v935, %v1005
    %v1010 = vmul.f32 %v938, %v1002
    %v1011 = vmul.f32 %v938, %v1003
    %v1012 = vmul.f32 %v938, %v1004
    %v1013 = vmul.f32 %v938, %v1005
    %v1015 = vsel %vm377, %v1006, 0
    %v1018 = vsel %vm377, %v1007, 0
    %v1021 = vsel %vm377, %v1008, 0
    %v1024 = vsel %vm377, %v1009, 0
    %v1027 = vsel %vm377, %v966, 0
    %1029 = vmatpush.xpose.msra.mxu0 0.0
    %1030 = vmatpush.xpose.msra.mxu0 0.0
    %1031 = vmatpush.xpose.msra.mxu0 0.0
    %1032 = vmatpush.xpose.msra.mxu0 0.0
    %1033 = vmatpush.xpose.msra.mxu0 0.0
    %1034 = vmatpush.xpose.msra.mxu0 0.0
    %1035 = vmatpush.xpose.msra.mxu0 0.0
    %1036 = vmatpush.xpose.msra.mxu0 0.0
    %1037 = vmatpush.xpose.msra.mxu0 0.0
    %1038 = vmatpush.xpose.msra.mxu0 0.0
    %1039 = vmatpush.xpose.msra.mxu0 0.0
    %1040 = vmatpush.xpose.msra.mxu0 0.0
    %1041 = vmatpush.xpose.msra.mxu0 0.0
    %1042 = vmatpush.xpose.msra.mxu0 0.0
    %1043 = vmatpush.xpose.msra.mxu0 0.0
    %1044 = vmatpush.xpose.msra.mxu0 %v1027
    %1045 = vmatmul.f32.gmra.mxu0 %v1015
    %v1046 = vpop.f32.mrf.mxu0
    %v1047 = vadd.f32 %v279, %v1046
    %1048 = vmatmul.f32.gmra.mxu0 %v1018
    %v1049 = vpop.f32.mrf.mxu0
    %v1050 = vadd.f32 %v279, %v1049
    %1051 = vmatmul.f32.gmra.mxu0 %v1021
    %v1052 = vpop.f32.mrf.mxu0
    %v1053 = vadd.f32 %v279, %v1052
    %1054 = vmatmul.f32.gmra.mxu0 %v1024
    %v1055 = vpop.f32.mrf.mxu0
    %v1056 = vadd.f32 %v279, %v1055
    %1057 = vdwg.mxu0
    %v1059 = vsel %vm377, %v1010, 0
    %v1062 = vsel %vm377, %v1011, 0
    %v1065 = vsel %vm377, %v1012, 0
    %v1068 = vsel %vm377, %v1013, 0
    %v1071 = vsel %vm377, %v969, 0
    %1073 = vmatpush.xpose.msra.mxu0 0.0
    %1074 = vmatpush.xpose.msra.mxu0 0.0
    %1075 = vmatpush.xpose.msra.mxu0 0.0
    %1076 = vmatpush.xpose.msra.mxu0 0.0
    %1077 = vmatpush.xpose.msra.mxu0 0.0
    %1078 = vmatpush.xpose.msra.mxu0 0.0
    %1079 = vmatpush.xpose.msra.mxu0 0.0
    %1080 = vmatpush.xpose.msra.mxu0 0.0
    %1081 = vmatpush.xpose.msra.mxu0 0.0
    %1082 = vmatpush.xpose.msra.mxu0 0.0
    %1083 = vmatpush.xpose.msra.mxu0 0.0
    %1084 = vmatpush.xpose.msra.mxu0 0.0
    %1085 = vmatpush.xpose.msra.mxu0 0.0
    %1086 = vmatpush.xpose.msra.mxu0 0.0
    %1087 = vmatpush.xpose.msra.mxu0 0.0
    %1088 = vmatpush.xpose.msra.mxu0 %v1071
    %1089 = vmatmul.f32.gmra.mxu0 %v1059
    %v1090 = vpop.f32.mrf.mxu0
    %v1091 = vadd.f32 %v280, %v1090
    %1092 = vmatmul.f32.gmra.mxu0 %v1062
    %v1093 = vpop.f32.mrf.mxu0
    %v1094 = vadd.f32 %v280, %v1093
    %1095 = vmatmul.f32.gmra.mxu0 %v1065
    %v1096 = vpop.f32.mrf.mxu0
    %v1097 = vadd.f32 %v280, %v1096
    %1098 = vmatmul.f32.gmra.mxu0 %v1068
    %v1099 = vpop.f32.mrf.mxu0
    %v1100 = vadd.f32 %v280, %v1099
    %1101 = vdwg.mxu0
    %v1102 = vsel %vm569, %v1047, -inf
    %1103 = vmax.xlane.f32.xlu0 %v1102
    %v1104 = vpop.xlane.xlu0 %1103
    %v1105 = vsel %vm569, %v1050, -inf
    %1106 = vmax.xlane.f32.xlu0 %v1105
    %v1107 = vpop.xlane.xlu0 %1106
    %v1108 = vsel %vm569, %v1053, -inf
    %1109 = vmax.xlane.f32.xlu0 %v1108
    %v1110 = vpop.xlane.xlu0 %1109
    %v1111 = vsel %vm569, %v1056, -inf
    %1112 = vmax.xlane.f32.xlu0 %v1111
    %v1113 = vpop.xlane.xlu0 %1112
    %v1114 = vsel %vm569, %v1091, -inf
    %1115 = vmax.xlane.f32.xlu0 %v1114
    %v1116 = vpop.xlane.xlu0 %1115
    %v1117 = vsel %vm569, %v1094, -inf
    %1118 = vmax.xlane.f32.xlu0 %v1117
    %v1119 = vpop.xlane.xlu0 %1118
    %v1120 = vsel %vm569, %v1097, -inf
    %1121 = vmax.xlane.f32.xlu0 %v1120
    %v1122 = vpop.xlane.xlu0 %1121
    %v1123 = vsel %vm569, %v1100, -inf
    %1124 = vmax.xlane.f32.xlu0 %v1123
    %v1125 = vpop.xlane.xlu0 %1124
    %v1126 = vsub.f32 %v1047, %v1104
    %v1127 = vsub.f32 %v1050, %v1107
    %v1128 = vsub.f32 %v1053, %v1110
    %v1129 = vsub.f32 %v1056, %v1113
    %v1130 = vsub.f32 %v1091, %v1116
    %v1131 = vsub.f32 %v1094, %v1119
    %v1132 = vsub.f32 %v1097, %v1122
    %v1133 = vsub.f32 %v1100, %v1125
    %v1134 = vmul.f32 %v1126, 1.442695
    %v1135 = vpow.pop %v1134
    %v1136 = vmul.f32 %v1127, 1.442695
    %v1137 = vpow.pop %v1136
    %v1138 = vmul.f32 %v1128, 1.442695
    %v1139 = vpow.pop %v1138
    %v1140 = vmul.f32 %v1129, 1.442695
    %v1141 = vpow.pop %v1140
    %v1142 = vmul.f32 %v1130, 1.442695
    %v1143 = vpow.pop %v1142
    %v1144 = vmul.f32 %v1131, 1.442695
    %v1145 = vpow.pop %v1144
    %v1146 = vmul.f32 %v1132, 1.442695
    %v1147 = vpow.pop %v1146
    %v1148 = vmul.f32 %v1133, 1.442695
    %v1149 = vpow.pop %v1148
    %v1150 = vsel %vm569, %v1135, 0.0
    %1151 = vadd.xlane.f32.xlu0 %v1150
    %v1152 = vpop.xlane.xlu0 %1151
    %v1153 = vsel %vm569, %v1137, 0.0
    %1154 = vadd.xlane.f32.xlu0 %v1153
    %v1155 = vpop.xlane.xlu0 %1154
    %v1156 = vsel %vm569, %v1139, 0.0
    %1157 = vadd.xlane.f32.xlu0 %v1156
    %v1158 = vpop.xlane.xlu0 %1157
    %v1159 = vsel %vm569, %v1141, 0.0
    %1160 = vadd.xlane.f32.xlu0 %v1159
    %v1161 = vpop.xlane.xlu0 %1160
    %v1162 = vsel %vm569, %v1143, 0.0
    %1163 = vadd.xlane.f32.xlu0 %v1162
    %v1164 = vpop.xlane.xlu0 %1163
    %v1165 = vsel %vm569, %v1145, 0.0
    %1166 = vadd.xlane.f32.xlu0 %v1165
    %v1167 = vpop.xlane.xlu0 %1166
    %v1168 = vsel %vm569, %v1147, 0.0
    %1169 = vadd.xlane.f32.xlu0 %v1168
    %v1170 = vpop.xlane.xlu0 %1169
    %v1171 = vsel %vm569, %v1149, 0.0
    %1172 = vadd.xlane.f32.xlu0 %v1171
    %v1173 = vpop.xlane.xlu0 %1172
    %v1174 = vrcp.pop %v1152
    %v1175 = vrcp.pop %v1155
    %v1176 = vrcp.pop %v1158
    %v1177 = vrcp.pop %v1161
    %v1178 = vrcp.pop %v1164
    %v1179 = vrcp.pop %v1167
    %v1180 = vrcp.pop %v1170
    %v1181 = vrcp.pop %v1173
    %v1182 = vmul.f32 %v1152, %v1174
    %v1183 = vmul.f32 %v1155, %v1175
    %v1184 = vmul.f32 %v1158, %v1176
    %v1185 = vmul.f32 %v1161, %v1177
    %v1186 = vmul.f32 %v1164, %v1178
    %v1187 = vmul.f32 %v1167, %v1179
    %v1188 = vmul.f32 %v1170, %v1180
    %v1189 = vmul.f32 %v1173, %v1181
    %v1190 = vsub.f32 2.0, %v1182
    %v1191 = vsub.f32 2.0, %v1183
    %v1192 = vsub.f32 2.0, %v1184
    %v1193 = vsub.f32 2.0, %v1185
    %v1194 = vsub.f32 2.0, %v1186
    %v1195 = vsub.f32 2.0, %v1187
    %v1196 = vsub.f32 2.0, %v1188
    %v1197 = vsub.f32 2.0, %v1189
    %v1198 = vmul.f32 %v1174, %v1190
    %v1199 = vmul.f32 %v1175, %v1191
    %v1200 = vmul.f32 %v1176, %v1192
    %v1201 = vmul.f32 %v1177, %v1193
    %v1202 = vmul.f32 %v1178, %v1194
    %v1203 = vmul.f32 %v1179, %v1195
    %v1204 = vmul.f32 %v1180, %v1196
    %v1205 = vmul.f32 %v1181, %v1197
    %v1206 = vmul.f32 %v1135, %v1198
    %v1207 = vmul.f32 %v1137, %v1199
    %v1208 = vmul.f32 %v1139, %v1200
    %v1209 = vmul.f32 %v1141, %v1201
    %v1210 = vmul.f32 %v1143, %v1202
    %v1211 = vmul.f32 %v1145, %v1203
    %v1212 = vmul.f32 %v1147, %v1204
    %v1213 = vmul.f32 %v1149, %v1205
    %v1215 = vsel %vm569, %v1206, 0
    %v1218 = vsel %vm569, %v1207, 0
    %v1221 = vsel %vm569, %v1208, 0
    %v1224 = vsel %vm569, %v1209, 0
    %1226 = vmatpush.msra.mxu0 0.0
    %1227 = vmatpush.msra.mxu0 0.0
    %1228 = vmatpush.msra.mxu0 0.0
    %1229 = vmatpush.msra.mxu0 0.0
    %1230 = vmatpush.msra.mxu0 0.0
    %1231 = vmatpush.msra.mxu0 0.0
    %1232 = vmatpush.msra.mxu0 0.0
    %1233 = vmatpush.msra.mxu0 0.0
    %1234 = vmatpush.msra.mxu0 0.0
    %1235 = vmatpush.msra.mxu0 0.0
    %1236 = vmatpush.msra.mxu0 0.0
    %1237 = vmatpush.msra.mxu0 0.0
    %1238 = vmatpush.msra.mxu0 0.0
    %1239 = vmatpush.msra.mxu0 0.0
    %1240 = vmatpush.msra.mxu0 0.0
    %1241 = vmatpush.msra.mxu0 %v997
    %1242 = vmatmul.f32.gmra.mxu0 %v1215
    %v1243 = vpop.f32.mrf.mxu0
    %v1244 = vadd.f32 0.0, %v1243
    %1245 = vmatmul.f32.gmra.mxu0 %v1218
    %v1246 = vpop.f32.mrf.mxu0
    %v1247 = vadd.f32 0.0, %v1246
    %1248 = vmatmul.f32.gmra.mxu0 %v1221
    %v1249 = vpop.f32.mrf.mxu0
    %v1250 = vadd.f32 0.0, %v1249
    %1251 = vmatmul.f32.gmra.mxu0 %v1224
    %v1252 = vpop.f32.mrf.mxu0
    %v1253 = vadd.f32 0.0, %v1252
    %1254 = vdwg.mxu0
    %v1256 = vsel %vm569, %v1210, 0
    %v1259 = vsel %vm569, %v1211, 0
    %v1262 = vsel %vm569, %v1212, 0
    %v1265 = vsel %vm569, %v1213, 0
    %1267 = vmatpush.msra.mxu0 0.0
    %1268 = vmatpush.msra.mxu0 0.0
    %1269 = vmatpush.msra.mxu0 0.0
    %1270 = vmatpush.msra.mxu0 0.0
    %1271 = vmatpush.msra.mxu0 0.0
    %1272 = vmatpush.msra.mxu0 0.0
    %1273 = vmatpush.msra.mxu0 0.0
    %1274 = vmatpush.msra.mxu0 0.0
    %1275 = vmatpush.msra.mxu0 0.0
    %1276 = vmatpush.msra.mxu0 0.0
    %1277 = vmatpush.msra.mxu0 0.0
    %1278 = vmatpush.msra.mxu0 0.0
    %1279 = vmatpush.msra.mxu0 0.0
    %1280 = vmatpush.msra.mxu0 0.0
    %1281 = vmatpush.msra.mxu0 0.0
    %1282 = vmatpush.msra.mxu0 %v1000
    %1283 = vmatmul.f32.gmra.mxu0 %v1256
    %v1284 = vpop.f32.mrf.mxu0
    %v1285 = vadd.f32 0.0, %v1284
    %1286 = vmatmul.f32.gmra.mxu0 %v1259
    %v1287 = vpop.f32.mrf.mxu0
    %v1288 = vadd.f32 0.0, %v1287
    %1289 = vmatmul.f32.gmra.mxu0 %v1262
    %v1290 = vpop.f32.mrf.mxu0
    %v1291 = vadd.f32 0.0, %v1290
    %1292 = vmatmul.f32.gmra.mxu0 %v1265
    %v1293 = vpop.f32.mrf.mxu0
    %v1294 = vadd.f32 0.0, %v1293
    %1295 = vdwg.mxu0
    %v1296 = vld [vmem:[#allocation17] sm:$0xff]
    %v1297 = vld [vmem:[#allocation17 + $0x8] sm:$0xff]
    %v1298 = vld [vmem:[#allocation17 + $0x10] sm:$0xff]
    %v1299 = vld [vmem:[#allocation17 + $0x18] sm:$0xff]
    %v1300 = vmul.f32 %v1244, %v1296
    %v1301 = vmul.f32 %v1247, %v1297
    %v1302 = vmul.f32 %v1250, %v1298
    %v1303 = vmul.f32 %v1253, %v1299
    %v1304 = vmul.f32 %v1285, %v1296
    %v1305 = vmul.f32 %v1288, %v1297
    %v1306 = vmul.f32 %v1291, %v1298
    %v1307 = vmul.f32 %v1294, %v1299
    %v1308 = vadd.f32 %v1300, %v1301
    %v1309 = vadd.f32 %v1304, %v1305
    %v1310 = vadd.f32 %v1206, %v1207
    %v1311 = vadd.f32 %v1210, %v1211
    %v1312 = vadd.f32 %v1308, %v1302
    %v1313 = vadd.f32 %v1309, %v1306
    %v1314 = vadd.f32 %v1310, %v1208
    %v1315 = vadd.f32 %v1311, %v1212
    %v1316 = vadd.f32 %v1312, %v1303
    %v1317 = vadd.f32 %v1313, %v1307
    %v1318 = vadd.f32 %v1314, %v1209
    %v1319 = vadd.f32 %v1315, %v1213
    %v1320 = vld [vmem:[#allocation14] sm:$0xff]
    %v1321 = vld [vmem:[#allocation14 + $0x8] sm:$0xff]
    %v1322 = vld [vmem:[#allocation14 + $0x10] sm:$0xff]
    %v1323 = vld [vmem:[#allocation14 + $0x18] sm:$0xff]
    %v1324 = vld [vmem:[%s55] sm:$0x1]
    %v1326 = vperm.slane %v1324, 0
    %v1329 = vsel %vm377, %v1316, 0
    %v1332 = vsel %vm377, %v1317, 0
    %1334 = vmatpush.msra.mxu0 0.0
    %1335 = vmatpush.msra.mxu0 0.0
    %1336 = vmatpush.msra.mxu0 0.0
    %1337 = vmatpush.msra.mxu0 0.0
    %1338 = vmatpush.msra.mxu0 0.0
    %1339 = vmatpush.msra.mxu0 0.0
    %1340 = vmatpush.msra.mxu0 0.0
    %1341 = vmatpush.msra.mxu0 0.0
    %1342 = vmatpush.msra.mxu0 0.0
    %1343 = vmatpush.msra.mxu0 0.0
    %1344 = vmatpush.msra.mxu0 0.0
    %1345 = vmatpush.msra.mxu0 0.0
    %1346 = vmatpush.msra.mxu0 %v1323
    %1347 = vmatpush.msra.mxu0 %v1322
    %1348 = vmatpush.msra.mxu0 %v1321
    %1349 = vmatpush.msra.mxu0 %v1320
    %1350 = vmatmul.f32.gmra.mxu0 %v1329
    %v1351 = vpop.f32.mrf.mxu0
    %v1352 = vadd.f32 %v1326, %v1351
    %1353 = vmatmul.f32.gmra.mxu0 %v1332
    %v1354 = vpop.f32.mrf.mxu0
    %v1355 = vadd.f32 %v1326, %v1354
    %1356 = vdwg.mxu0
    %v1357 = vmul.f32 %v1318, 0.25
    %v1358 = vmul.f32 %v1319, 0.25
    %1359 = vst [vmem:[#allocation19] sm:$0xff] %v1352
    %1360 = vst [vmem:[#allocation19 + $0x8] sm:$0xff] %v1355
    %1361 = vst.msk [vmem:[#allocation20] sm:$0xff] %vm569, %v1357
    %1362 = vst.msk [vmem:[#allocation20 + $0x8] sm:$0xff] %vm569, %v1358
    // Predicated region
    $region162: #{tpu_custom_call.1} parent=1 // pred_check
      _
    $region163: #{tpu_custom_call.1} parent=1 // pred_check_branch
      %1364 = sbr.rel (0) target = $region165
    $region164: #{tpu_custom_call.1} parent=1 // pred_region
      %1366 = vsyncadd [#allocation4], 0
      %s1367 = sshll.u32 [#allocation19], 4
      %s1368 = int_to_ptr.vmem [resolvable:$true] %s1367
      %s1369 = sshll.u32 %s61, 4
      %s1370 = int_to_ptr.hbm [resolvable:$true] %s1369
      %1375 = dma.vmem_to_hbm [thread:$0]  %s1368, 256, %s1370, [#allocation4], 128, 128, 8
    $region165: #{tpu_custom_call.1} parent=1 // pred_fallthru
      _
    // Predicated region
    $region166: #{tpu_custom_call.1} parent=1 // pred_check
      _
    $region167: #{tpu_custom_call.1} parent=1 // pred_check_branch
      %1377 = sbr.rel (0) target = $region169
    $region168: #{tpu_custom_call.1} parent=1 // pred_region
      %1379 = vsyncadd [#allocation21], 0
      %s1380 = sshll.u32 [#allocation20], 4
      %s1381 = int_to_ptr.vmem [resolvable:$true] %s1380
      %s1382 = sshll.u32 %s63, 4
      %s1383 = int_to_ptr.hbm [resolvable:$true] %s1382
      %1388 = dma.vmem_to_hbm [thread:$0]  %s1381, 256, %s1383, [#allocation21], 128, 128, 8
    $region169: #{tpu_custom_call.1} parent=1 // pred_fallthru
      _
    // Predicated region
    $region170: #{tpu_custom_call.1} parent=1 // pred_check
      _
    $region171: #{tpu_custom_call.1} parent=1 // pred_check_branch
      %1390 = sbr.rel (0) target = $region173
    $region172: #{tpu_custom_call.1} parent=1 // pred_region
      %1392 = dma.done [#allocation4], 256
    $region173: #{tpu_custom_call.1} parent=1 // pred_fallthru
      _
    // Predicated region
    $region174: #{tpu_custom_call.1} parent=1 // pred_check
      _
    $region175: #{tpu_custom_call.1} parent=1 // pred_check_branch
      %1394 = sbr.rel (0) target = $region177
    $region176: #{tpu_custom_call.1} parent=1 // pred_region
      %1396 = dma.done [#allocation21], 256
    $region177: #{tpu_custom_call.1} parent=1 // pred_fallthru
      _
    %1397 = vsyncpa [#allocation3], 1
    %1398 = vsyncpa [#allocation6], 1
    %1399 = vsyncpa [#allocation9], 1
    %1400 = vsyncpa [#allocation12], 1
    %1401 = vsyncpa [#allocation15], 1
    %1402 = vsyncpa [#allocation18], 1
    %1403 = vsyncpa [#allocation4], 1
    %1404 = vsyncpa [#allocation21], 1

</llo_original>
